<compile_context>
chip_gen: v7x
topology: tpu7x:2x2x1
jax: 0.10.0
libtpu: 0.0.40
codegen_flags: <defaults>
</compile_context>

<pallas_src>
import functools

import jax
import jax.numpy as jnp
from jax.experimental import pallas as pl
from jax.experimental.pallas import tpu as pltpu

EULER_GAMMA = 0.57721566490153286060
EPS_TINY = float(jnp.finfo(jnp.float32).tiny)
NEG_RATIO = 1.0


def _round_up(x, m):
    return ((x + m - 1) // m) * m


# ----------------------------------------------------------------------------
# In-kernel math helper (traced inside the Pallas kernel body)
# ----------------------------------------------------------------------------
def _log_volume(delta, gumbel_beta):
    # sum_d log( clamp_min( softplus(delta_d - 2*gamma*beta), tiny ) )
    x = jax.nn.softplus(delta - 2.0 * EULER_GAMMA * gumbel_beta)
    return jnp.sum(jnp.log(jnp.maximum(x, EPS_TINY)), axis=-1, keepdims=True)


# ----------------------------------------------------------------------------
# Fused kernel: BEUrRE score -> weighted SSE  +  weighted L2 regularization
# Each grid step writes its own (8,128) partial-sum tile:
#   row 0, lane 0 -> partial weighted squared-error sum
#   row 1, lane 0 -> partial weighted L2 sum
# ----------------------------------------------------------------------------
def fused_loss_kernel(h_min_ref, h_dlog_ref, t_min_ref, t_dlog_ref,
                      rt_h_ref, rs_h_ref, rt_t_ref, rs_t_ref,
                      scal_ref, out_ref,
                      *, gumbel_beta, delta_coff, min_coff,
                      rel_trans_coff, rel_scale_coff):
    b = gumbel_beta
    inv_b = 1.0 / gumbel_beta          # multiply instead of 4 full-width divides

    h_min = h_min_ref[...]
    t_min = t_min_ref[...]
    rt_h = rt_h_ref[...]
    rt_t = rt_t_ref[...]

    # exp() results shared between the score and the L2 term (EUP work done once)
    h_delta = jnp.exp(h_dlog_ref[...])
    t_delta = jnp.exp(t_dlog_ref[...])
    sh = jnp.exp(rs_h_ref[...])
    st = jnp.exp(rs_t_ref[...])

    # relation-specific affine transform of the entity Gumbel boxes
    th_min = h_min * sh + rt_h
    th_max = th_min + h_delta * sh
    tt_min = t_min * st + rt_t
    tt_max = tt_min + t_delta * st

    # Gumbel-box intersection
    i_min = b * jnp.logaddexp(th_min * inv_b, tt_min * inv_b)
    i_min = jnp.maximum(i_min, jnp.maximum(th_min, tt_min))
    i_max = -b * jnp.logaddexp(-th_max * inv_b, -tt_max * inv_b)
    i_max = jnp.minimum(i_max, jnp.minimum(th_max, tt_max))

    log_int = _log_volume(i_max - i_min, b)        # [tb, 1]
    log_tail = _log_volume(tt_max - tt_min, b)     # [tb, 1]
    pred = jnp.exp(log_int - log_tail)             # [tb, 1]  P(h | t)

    # packed per-row scalars: [truth, mse_weight, l2_weight]
    scal = scal_ref[...]                           # [tb, 3]
    truth = scal[:, 0:1]
    mse_w = scal[:, 1:2]                           # carries NEG_RATIO, 0 on pad
    l2_w = scal[:, 2:3]                            # 1 on positive rows, else 0

    # weighted squared error partial sum
    err = pred - truth
    sse_p = jnp.sum(mse_w * err * err, keepdims=True)      # (1, 1)

    def wnorm(x):  # weighted sum over rows of per-row L2 norm (torch.norm dim=1)
        return jnp.sum(l2_w * jnp.sqrt(jnp.sum(x * x, axis=-1, keepdims=True)),
                       keepdims=True)

    l2_p = (delta_coff * (wnorm(h_delta) + wnorm(t_delta))
            + min_coff * (wnorm(h_min) + wnorm(t_min))
            + rel_trans_coff * (wnorm(jnp.exp(rt_h)) + wnorm(jnp.exp(rt_t)))
            + rel_scale_coff * (wnorm(sh) + wnorm(st)))     # (1, 1)

    # lane-aligned (8,128) output tile: row 0 = sse partial, rows 1..7 = l2
    row_id = jax.lax.broadcasted_iota(jnp.int32, (8, 128), 0)
    out_ref[...] = jnp.where(row_id == 0,
                             jnp.broadcast_to(sse_p, (8, 128)),
                             jnp.broadcast_to(l2_p, (8, 128)))


def beurre_fused_loss_sums(gathered, truth, mse_weight, l2_weight, reg, *,
                           gumbel_beta, tb=512, vmem_limit_bytes=None):
    """Returns (sum of weighted squared errors, sum of weighted L2 norms)."""
    N, D = gathered[0].shape
    # Big rows-per-block tile (sweep 256-1024); clamp for tiny batches and pad
    # the tail with zero-weight rows so no real row is ever dropped.
    tb = int(min(tb, _round_up(N, 8)))
    n_pad = _round_up(N, tb)
    pad = n_pad - N
    num_blocks = n_pad // tb

    def pad_rows(x):
        return jnp.pad(x, ((0, pad), (0, 0))) if pad else x

    # TODO(synk): on bandwidth-bound v5e, stream these as bf16 and upcast in-kernel.
    ins2d = [pad_rows(g.astype(jnp.float32)) for g in gathered]
    scal = jnp.stack([truth.astype(jnp.float32),
                      mse_weight.astype(jnp.float32),
                      l2_weight.astype(jnp.float32)], axis=1)   # [N, 3]
    scal = pad_rows(scal)

    spec2d = pl.BlockSpec((tb, D), lambda i: (i, 0))
    spec_scal = pl.BlockSpec((tb, 3), lambda i: (i, 0))
    spec_out = pl.BlockSpec((8, 128), lambda i: (i, 0))

    kernel = functools.partial(
        fused_loss_kernel,
        gumbel_beta=float(gumbel_beta),
        delta_coff=float(reg["delta"]),
        min_coff=float(reg["min"]),
        rel_trans_coff=float(reg["rel_trans"]),
        rel_scale_coff=float(reg["rel_scale"]))

    partials = pl.pallas_call(
        kernel,
        out_shape=jax.ShapeDtypeStruct((num_blocks * 8, 128), jnp.float32),
        grid_spec=pltpu.PrefetchScalarGridSpec(
            num_scalar_prefetch=0,
            grid=(num_blocks,),
            in_specs=[spec2d] * 8 + [spec_scal],
            out_specs=spec_out),
        compiler_params=pltpu.CompilerParams(
            dimension_semantics=("parallel",),
            vmem_limit_bytes=vmem_limit_bytes),
    )(*ins2d, scal)

    partials = partials.reshape(num_blocks, 8, 128)
    sse_sum = jnp.sum(partials[:, 0, 0])
    l2_sum = jnp.sum(partials[:, 1, 0])
    return sse_sum, l2_sum


# ----------------------------------------------------------------------------
# Plain-JAX glue: parameter gather, negative sampling, loss composition
# ----------------------------------------------------------------------------
def gather_triple_params(params, triples):
    h = triples[:, 0]
    r = triples[:, 1]
    t = triples[:, 2]
    return (params["min_embedding"][h], params["delta_embedding"][h],
            params["min_embedding"][t], params["delta_embedding"][t],
            params["rel_trans_for_head"][r], params["rel_scale_for_head"][r],
            params["rel_trans_for_tail"][r], params["rel_scale_for_tail"][r])


def random_negative_sampling(key, triples, n_ent):
    # TODO(synk): unKR filters out known-true triples when corrupting; the
    # filtered re-sampling loop has no clean kernel equivalent and is omitted.
    B = triples.shape[0]
    k1, k2 = jax.random.split(key)
    corrupt_head = jax.random.bernoulli(k1, 0.5, (B,))
    rand_ent = jax.random.randint(k2, (B,), 0, n_ent, dtype=jnp.int32)
    h = jnp.where(corrupt_head, rand_ent, triples[:, 0])
    t = jnp.where(corrupt_head, triples[:, 2], rand_ent)
    return jnp.stack([h, triples[:, 1], t], axis=1)


def _prepare_fused_inputs(params, ids, *, n_ent, neg_key):
    """Build the concatenated pos+neg gathered tensors and per-row weights."""
    B = ids.shape[0]
    pos_triples = ids[:, :3].astype(jnp.int32)
    confidences = ids[:, 3].astype(jnp.float32)

    neg_triples = random_negative_sampling(neg_key, pos_triples, n_ent)

    # Gather once for the concatenated pos+neg index set (one gather per table).
    # TODO(synk): for very large B, replace this XLA gather with scalar-prefetch
    # row indexing (PrefetchScalarGridSpec) to avoid materializing [2B, D] copies.
    all_triples = jnp.concatenate([pos_triples, neg_triples], axis=0)
    gathered = gather_triple_params(params, all_triples)

    truth = jnp.concatenate([confidences, jnp.zeros((B,), jnp.float32)])
    mse_w = jnp.concatenate([jnp.ones((B,), jnp.float32),
                             jnp.full((B,), NEG_RATIO, jnp.float32)])
    l2_w = jnp.concatenate([jnp.ones((B,), jnp.float32),   # L2 uses positives
                            jnp.zeros((B,), jnp.float32)])
    return gathered, truth, mse_w, l2_w, B


def beurre_loss_forward(params, ids, reg, *, gumbel_beta, n_ent, neg_key,
                        tb=512):
    """Equivalent of BEUrRE_Loss.forward(model, ids, negative_samples, args)."""
    gathered, truth, mse_w, l2_w, B = _prepare_fused_inputs(
        params, ids, n_ent=n_ent, neg_key=neg_key)

    # TODO(synk): PyTorch computes the MSE in float64; TPU kernels use float32.
    sse_sum, l2_sum = beurre_fused_loss_sums(
        gathered, truth, mse_w, l2_w, reg, gumbel_beta=gumbel_beta, tb=tb)

    main_loss = sse_sum / B          # = pos_MSE + NEG_RATIO * neg_MSE
    l2_reg = l2_sum / B              # means over the positive batch

    # TODO(synk): args has no RULE_CONFIGS here, so logic_loss == 0 (the
    # transitive/composition rule losses live inside the unprovided model).
    logic_loss = 0.0
    return main_loss + l2_reg + logic_loss


# ----------------------------------------------------------------------------
# Pure-JAX reference (same f32 math) for validation
# ----------------------------------------------------------------------------
def beurre_loss_reference(params, ids, reg, *, gumbel_beta, n_ent, neg_key):
    gathered, truth, mse_w, l2_w, B = _prepare_fused_inputs(
        params, ids, n_ent=n_ent, neg_key=neg_key)
    (h_min, h_dlog, t_min, t_dlog, rt_h, rs_h, rt_t, rs_t) = gathered
    b = gumbel_beta
    h_delta = jnp.exp(h_dlog)
    t_delta = jnp.exp(t_dlog)
    sh = jnp.exp(rs_h)
    st = jnp.exp(rs_t)
    th_min = h_min * sh + rt_h
    th_max = th_min + h_delta * sh
    tt_min = t_min * st + rt_t
    tt_max = tt_min + t_delta * st
    i_min = jnp.maximum(b * jnp.logaddexp(th_min / b, tt_min / b),
                        jnp.maximum(th_min, tt_min))
    i_max = jnp.minimum(-b * jnp.logaddexp(-th_max / b, -tt_max / b),
                        jnp.minimum(th_max, tt_max))

    def logvol(d):
        x = jax.nn.softplus(d - 2.0 * EULER_GAMMA * b)
        return jnp.sum(jnp.log(jnp.maximum(x, EPS_TINY)), axis=-1)

    pred = jnp.exp(logvol(i_max - i_min) - logvol(tt_max - tt_min))
    err = pred - truth
    sse = jnp.sum(mse_w * err * err)

    def nsum(x):
        return jnp.sum(l2_w * jnp.sqrt(jnp.sum(x * x, axis=-1)))

    l2 = (reg["delta"] * (nsum(h_delta) + nsum(t_delta))
          + reg["min"] * (nsum(h_min) + nsum(t_min))
          + reg["rel_trans"] * (nsum(jnp.exp(rt_h)) + nsum(jnp.exp(rt_t)))
          + reg["rel_scale"] * (nsum(jnp.exp(rs_h)) + nsum(jnp.exp(rs_t))))
    return sse / B + l2 / B


# ----------------------------------------------------------------------------
# Driver
# ----------------------------------------------------------------------------
if __name__ == "__main__":
    key = jax.random.PRNGKey(0)
    B, D = 16, 128          # batch of triples, embedding dim
    n_ent, n_rel = 32, 8
    gumbel_beta = 0.1
    reg = {"delta": 0.01, "min": 0.01, "rel_trans": 0.01, "rel_scale": 0.01,
           "transitive": 0.0, "composite": 0.0}

    ks = jax.random.split(key, 10)
    params = {
        "min_embedding": jax.random.uniform(ks[0], (n_ent, D), jnp.float32,
                                            1e-4, 0.5),
        "delta_embedding": jax.random.uniform(ks[1], (n_ent, D), jnp.float32,
                                              -0.1, -1e-3),
        "rel_trans_for_head": 0.1 * jax.random.normal(ks[2], (n_rel, D),
                                                      jnp.float32),
        "rel_scale_for_head": 0.1 * jax.random.normal(ks[3], (n_rel, D),
                                                      jnp.float32),
        "rel_trans_for_tail": 0.1 * jax.random.normal(ks[4], (n_rel, D),
                                                      jnp.float32),
        "rel_scale_for_tail": 0.1 * jax.random.normal(ks[5], (n_rel, D),
                                                      jnp.float32),
    }

    heads = jax.random.randint(ks[6], (B,), 0, n_ent, dtype=jnp.int32)
    rels = jax.random.randint(ks[7], (B,), 0, n_rel, dtype=jnp.int32)
    tails = jax.random.randint(ks[8], (B,), 0, n_ent, dtype=jnp.int32)
    confs = jax.random.uniform(ks[9], (B,), jnp.float32)
    ids = jnp.concatenate(
        [heads[:, None].astype(jnp.float32),
         rels[:, None].astype(jnp.float32),
         tails[:, None].astype(jnp.float32),
         confs[:, None]], axis=1)

    neg_key = jax.random.PRNGKey(1)
    loss = beurre_loss_forward(params, ids, reg, gumbel_beta=gumbel_beta,
                               n_ent=n_ent, neg_key=neg_key)
    jax.block_until_ready(loss)
    assert jnp.isfinite(loss)

    ref = beurre_loss_reference(params, ids, reg, gumbel_beta=gumbel_beta,
                                n_ent=n_ent, neg_key=neg_key)
    jax.block_until_ready(ref)
    assert jnp.allclose(loss, ref, rtol=1e-3, atol=1e-4), (loss, ref)

    print("KERNEL_OK")
</pallas_src>

<mosaic_0001>
module attributes {stable_mosaic.version = 11 : i64} {
  func.func @fused_loss_kernel(%arg0: i32, %arg1: memref<32x128xf32, #tpu.memory_space<vmem>>, %arg2: memref<32x128xf32, #tpu.memory_space<vmem>>, %arg3: memref<32x128xf32, #tpu.memory_space<vmem>>, %arg4: memref<32x128xf32, #tpu.memory_space<vmem>>, %arg5: memref<32x128xf32, #tpu.memory_space<vmem>>, %arg6: memref<32x128xf32, #tpu.memory_space<vmem>>, %arg7: memref<32x128xf32, #tpu.memory_space<vmem>>, %arg8: memref<32x128xf32, #tpu.memory_space<vmem>>, %arg9: memref<32x3xf32, #tpu.memory_space<vmem>>, %arg10: memref<8x128xf32, #tpu.memory_space<vmem>>) attributes {dimension_semantics = [#tpu.dimension_semantics<parallel>], iteration_bounds = array<i64: 1>, scalar_prefetch = 0 : i64, scratch_operands = 0 : i64, tpu.core_type = #tpu.core_type<tc>, window_params = [{transform_indices = @transform_0, window_bounds = array<i64: 32, 128>}, {transform_indices = @transform_1, window_bounds = array<i64: 32, 128>}, {transform_indices = @transform_2, window_bounds = array<i64: 32, 128>}, {transform_indices = @transform_3, window_bounds = array<i64: 32, 128>}, {transform_indices = @transform_4, window_bounds = array<i64: 32, 128>}, {transform_indices = @transform_5, window_bounds = array<i64: 32, 128>}, {transform_indices = @transform_6, window_bounds = array<i64: 32, 128>}, {transform_indices = @transform_7, window_bounds = array<i64: 32, 128>}, {transform_indices = @transform_8, window_bounds = array<i64: 32, 3>}, {transform_indices = @transform_9, window_bounds = array<i64: 8, 128>}]} {
    %c0 = arith.constant 0 : index
    %c0_0 = arith.constant 0 : index
    %0 = vector.load %arg1[%c0, %c0_0] : memref<32x128xf32, #tpu.memory_space<vmem>>, vector<32x128xf32>
    %c0_1 = arith.constant 0 : index
    %c0_2 = arith.constant 0 : index
    %1 = vector.load %arg3[%c0_1, %c0_2] : memref<32x128xf32, #tpu.memory_space<vmem>>, vector<32x128xf32>
    %c0_3 = arith.constant 0 : index
    %c0_4 = arith.constant 0 : index
    %2 = vector.load %arg5[%c0_3, %c0_4] : memref<32x128xf32, #tpu.memory_space<vmem>>, vector<32x128xf32>
    %c0_5 = arith.constant 0 : index
    %c0_6 = arith.constant 0 : index
    %3 = vector.load %arg7[%c0_5, %c0_6] : memref<32x128xf32, #tpu.memory_space<vmem>>, vector<32x128xf32>
    %c0_7 = arith.constant 0 : index
    %c0_8 = arith.constant 0 : index
    %4 = vector.load %arg2[%c0_7, %c0_8] : memref<32x128xf32, #tpu.memory_space<vmem>>, vector<32x128xf32>
    %5 = math.exp %4 : vector<32x128xf32>
    %c0_9 = arith.constant 0 : index
    %c0_10 = arith.constant 0 : index
    %6 = vector.load %arg4[%c0_9, %c0_10] : memref<32x128xf32, #tpu.memory_space<vmem>>, vector<32x128xf32>
    %7 = math.exp %6 : vector<32x128xf32>
    %c0_11 = arith.constant 0 : index
    %c0_12 = arith.constant 0 : index
    %8 = vector.load %arg6[%c0_11, %c0_12] : memref<32x128xf32, #tpu.memory_space<vmem>>, vector<32x128xf32>
    %9 = math.exp %8 : vector<32x128xf32>
    %c0_13 = arith.constant 0 : index
    %c0_14 = arith.constant 0 : index
    %10 = vector.load %arg8[%c0_13, %c0_14] : memref<32x128xf32, #tpu.memory_space<vmem>>, vector<32x128xf32>
    %11 = math.exp %10 : vector<32x128xf32>
    %12 = arith.mulf %0, %9 : vector<32x128xf32>
    %13 = arith.addf %12, %2 : vector<32x128xf32>
    %14 = arith.mulf %5, %9 : vector<32x128xf32>
    %15 = arith.addf %13, %14 : vector<32x128xf32>
    %16 = arith.mulf %1, %11 : vector<32x128xf32>
    %17 = arith.addf %16, %3 : vector<32x128xf32>
    %18 = arith.mulf %7, %11 : vector<32x128xf32>
    %19 = arith.addf %17, %18 : vector<32x128xf32>
    %cst = arith.constant 1.000000e+01 : f32
    %20 = vector.broadcast %cst : f32 to vector<32x128xf32>
    %21 = arith.mulf %13, %20 : vector<32x128xf32>
    %cst_15 = arith.constant 1.000000e+01 : f32
    %22 = vector.broadcast %cst_15 : f32 to vector<32x128xf32>
    %23 = arith.mulf %17, %22 : vector<32x128xf32>
    %24 = arith.maximumf %21, %23 : vector<32x128xf32>
    %25 = arith.subf %21, %23 : vector<32x128xf32>
    %26 = arith.cmpf one, %25, %25 : vector<32x128xf32>
    %27 = arith.addf %21, %23 : vector<32x128xf32>
    %28 = math.absf %25 : vector<32x128xf32>
    %cst_16 = arith.constant 0.000000e+00 : f32
    %29 = vector.broadcast %cst_16 : f32 to vector<32x128xf32>
    %30 = arith.subf %29, %28 : vector<32x128xf32>
    %31 = math.exp %30 : vector<32x128xf32>
    %32 = math.log1p %31 : vector<32x128xf32>
    %33 = arith.addf %24, %32 : vector<32x128xf32>
    %34 = arith.select %26, %27, %33 : vector<32x128xi1>, vector<32x128xf32>
    %cst_17 = arith.constant 1.000000e-01 : f32
    %35 = vector.broadcast %cst_17 : f32 to vector<32x128xf32>
    %36 = arith.mulf %35, %34 : vector<32x128xf32>
    %37 = arith.maximumf %13, %17 : vector<32x128xf32>
    %38 = arith.maximumf %36, %37 : vector<32x128xf32>
    %cst_18 = arith.constant 0.000000e+00 : f32
    %39 = vector.broadcast %cst_18 : f32 to vector<32x128xf32>
    %40 = arith.subf %39, %15 : vector<32x128xf32>
    %cst_19 = arith.constant 1.000000e+01 : f32
    %41 = vector.broadcast %cst_19 : f32 to vector<32x128xf32>
    %42 = arith.mulf %40, %41 : vector<32x128xf32>
    %cst_20 = arith.constant 0.000000e+00 : f32
    %43 = vector.broadcast %cst_20 : f32 to vector<32x128xf32>
    %44 = arith.subf %43, %19 : vector<32x128xf32>
    %cst_21 = arith.constant 1.000000e+01 : f32
    %45 = vector.broadcast %cst_21 : f32 to vector<32x128xf32>
    %46 = arith.mulf %44, %45 : vector<32x128xf32>
    %47 = arith.maximumf %42, %46 : vector<32x128xf32>
    %48 = arith.subf %42, %46 : vector<32x128xf32>
    %49 = arith.cmpf one, %48, %48 : vector<32x128xf32>
    %50 = arith.addf %42, %46 : vector<32x128xf32>
    %51 = math.absf %48 : vector<32x128xf32>
    %cst_22 = arith.constant 0.000000e+00 : f32
    %52 = vector.broadcast %cst_22 : f32 to vector<32x128xf32>
    %53 = arith.subf %52, %51 : vector<32x128xf32>
    %54 = math.exp %53 : vector<32x128xf32>
    %55 = math.log1p %54 : vector<32x128xf32>
    %56 = arith.addf %47, %55 : vector<32x128xf32>
    %57 = arith.select %49, %50, %56 : vector<32x128xi1>, vector<32x128xf32>
    %cst_23 = arith.constant -1.000000e-01 : f32
    %58 = vector.broadcast %cst_23 : f32 to vector<32x128xf32>
    %59 = arith.mulf %58, %57 : vector<32x128xf32>
    %60 = arith.minimumf %15, %19 : vector<32x128xf32>
    %61 = arith.minimumf %59, %60 : vector<32x128xf32>
    %62 = arith.subf %61, %38 : vector<32x128xf32>
    %cst_24 = arith.constant 0.115443133 : f32
    %63 = vector.broadcast %cst_24 : f32 to vector<32x128xf32>
    %64 = arith.subf %62, %63 : vector<32x128xf32>
    %cst_25 = arith.constant 0.000000e+00 : f32
    %65 = vector.broadcast %cst_25 : f32 to vector<32x128xf32>
    %66 = arith.maximumf %64, %65 : vector<32x128xf32>
    %67 = vector.broadcast %cst_25 : f32 to vector<32x128xf32>
    %68 = arith.subf %64, %67 : vector<32x128xf32>
    %69 = arith.cmpf one, %68, %68 : vector<32x128xf32>
    %70 = vector.broadcast %cst_25 : f32 to vector<32x128xf32>
    %71 = arith.addf %64, %70 : vector<32x128xf32>
    %72 = math.absf %68 : vector<32x128xf32>
    %cst_26 = arith.constant 0.000000e+00 : f32
    %73 = vector.broadcast %cst_26 : f32 to vector<32x128xf32>
    %74 = arith.subf %73, %72 : vector<32x128xf32>
    %75 = math.exp %74 : vector<32x128xf32>
    %76 = math.log1p %75 : vector<32x128xf32>
    %77 = arith.addf %66, %76 : vector<32x128xf32>
    %78 = arith.select %69, %71, %77 : vector<32x128xi1>, vector<32x128xf32>
    %cst_27 = arith.constant 1.17549435E-38 : f32
    %79 = vector.broadcast %cst_27 : f32 to vector<32x128xf32>
    %80 = arith.maximumf %78, %79 : vector<32x128xf32>
    %81 = math.log %80 : vector<32x128xf32>
    %cst_28 = arith.constant dense<0.000000e+00> : vector<32xf32>
    %82 = vector.multi_reduction <add>, %81, %cst_28 [1] : vector<32x128xf32> to vector<32xf32>
    %83 = vector.shape_cast %82 : vector<32xf32> to vector<32x1xf32>
    %84 = arith.subf %19, %17 : vector<32x128xf32>
    %cst_29 = arith.constant 0.115443133 : f32
    %85 = vector.broadcast %cst_29 : f32 to vector<32x128xf32>
    %86 = arith.subf %84, %85 : vector<32x128xf32>
    %cst_30 = arith.constant 0.000000e+00 : f32
    %87 = vector.broadcast %cst_30 : f32 to vector<32x128xf32>
    %88 = arith.maximumf %86, %87 : vector<32x128xf32>
    %89 = vector.broadcast %cst_30 : f32 to vector<32x128xf32>
    %90 = arith.subf %86, %89 : vector<32x128xf32>
    %91 = arith.cmpf one, %90, %90 : vector<32x128xf32>
    %92 = vector.broadcast %cst_30 : f32 to vector<32x128xf32>
    %93 = arith.addf %86, %92 : vector<32x128xf32>
    %94 = math.absf %90 : vector<32x128xf32>
    %cst_31 = arith.constant 0.000000e+00 : f32
    %95 = vector.broadcast %cst_31 : f32 to vector<32x128xf32>
    %96 = arith.subf %95, %94 : vector<32x128xf32>
    %97 = math.exp %96 : vector<32x128xf32>
    %98 = math.log1p %97 : vector<32x128xf32>
    %99 = arith.addf %88, %98 : vector<32x128xf32>
    %100 = arith.select %91, %93, %99 : vector<32x128xi1>, vector<32x128xf32>
    %cst_32 = arith.constant 1.17549435E-38 : f32
    %101 = vector.broadcast %cst_32 : f32 to vector<32x128xf32>
    %102 = arith.maximumf %100, %101 : vector<32x128xf32>
    %103 = math.log %102 : vector<32x128xf32>
    %cst_33 = arith.constant dense<0.000000e+00> : vector<32xf32>
    %104 = vector.multi_reduction <add>, %103, %cst_33 [1] : vector<32x128xf32> to vector<32xf32>
    %105 = vector.shape_cast %104 : vector<32xf32> to vector<32x1xf32>
    %106 = arith.subf %83, %105 : vector<32x1xf32>
    %107 = math.exp %106 : vector<32x1xf32>
    %c0_34 = arith.constant 0 : index
    %c0_35 = arith.constant 0 : index
    %108 = vector.load %arg9[%c0_34, %c0_35] : memref<32x3xf32, #tpu.memory_space<vmem>>, vector<32x3xf32>
    %109 = vector.extract_strided_slice %108 {offsets = [0, 0], sizes = [32, 1], strides = [1, 1]} : vector<32x3xf32> to vector<32x1xf32>
    %110 = vector.extract_strided_slice %108 {offsets = [0, 1], sizes = [32, 1], strides = [1, 1]} : vector<32x3xf32> to vector<32x1xf32>
    %111 = vector.extract_strided_slice %108 {offsets = [0, 2], sizes = [32, 1], strides = [1, 1]} : vector<32x3xf32> to vector<32x1xf32>
    %112 = arith.subf %107, %109 : vector<32x1xf32>
    %113 = arith.mulf %110, %112 : vector<32x1xf32>
    %114 = arith.mulf %113, %112 : vector<32x1xf32>
    %115 = vector.shape_cast %114 : vector<32x1xf32> to vector<1x32x1xf32>
    %cst_36 = arith.constant dense<0.000000e+00> : vector<1xf32>
    %116 = vector.multi_reduction <add>, %115, %cst_36 [1, 2] : vector<1x32x1xf32> to vector<1xf32>
    %117 = vector.shape_cast %116 : vector<1xf32> to vector<1x1x1xf32>
    %118 = vector.extract %117[0, 0, 0] : f32 from vector<1x1x1xf32>
    %119 = vector.broadcast %118 : f32 to vector<1x1xf32>
    %120 = arith.mulf %5, %5 : vector<32x128xf32>
    %cst_37 = arith.constant dense<0.000000e+00> : vector<32xf32>
    %121 = vector.multi_reduction <add>, %120, %cst_37 [1] : vector<32x128xf32> to vector<32xf32>
    %122 = vector.shape_cast %121 : vector<32xf32> to vector<32x1xf32>
    %123 = math.sqrt %122 : vector<32x1xf32>
    %124 = arith.mulf %111, %123 : vector<32x1xf32>
    %125 = vector.shape_cast %124 : vector<32x1xf32> to vector<1x32x1xf32>
    %cst_38 = arith.constant dense<0.000000e+00> : vector<1xf32>
    %126 = vector.multi_reduction <add>, %125, %cst_38 [1, 2] : vector<1x32x1xf32> to vector<1xf32>
    %127 = vector.shape_cast %126 : vector<1xf32> to vector<1x1x1xf32>
    %128 = vector.extract %127[0, 0, 0] : f32 from vector<1x1x1xf32>
    %129 = vector.broadcast %128 : f32 to vector<1x1xf32>
    %130 = arith.mulf %7, %7 : vector<32x128xf32>
    %cst_39 = arith.constant dense<0.000000e+00> : vector<32xf32>
    %131 = vector.multi_reduction <add>, %130, %cst_39 [1] : vector<32x128xf32> to vector<32xf32>
    %132 = vector.shape_cast %131 : vector<32xf32> to vector<32x1xf32>
    %133 = math.sqrt %132 : vector<32x1xf32>
    %134 = arith.mulf %111, %133 : vector<32x1xf32>
    %135 = vector.shape_cast %134 : vector<32x1xf32> to vector<1x32x1xf32>
    %cst_40 = arith.constant dense<0.000000e+00> : vector<1xf32>
    %136 = vector.multi_reduction <add>, %135, %cst_40 [1, 2] : vector<1x32x1xf32> to vector<1xf32>
    %137 = vector.shape_cast %136 : vector<1xf32> to vector<1x1x1xf32>
    %138 = vector.extract %137[0, 0, 0] : f32 from vector<1x1x1xf32>
    %139 = vector.broadcast %138 : f32 to vector<1x1xf32>
    %140 = arith.addf %129, %139 : vector<1x1xf32>
    %cst_41 = arith.constant 0.00999999977 : f32
    %141 = vector.broadcast %cst_41 : f32 to vector<1x1xf32>
    %142 = arith.mulf %141, %140 : vector<1x1xf32>
    %143 = arith.mulf %0, %0 : vector<32x128xf32>
    %cst_42 = arith.constant dense<0.000000e+00> : vector<32xf32>
    %144 = vector.multi_reduction <add>, %143, %cst_42 [1] : vector<32x128xf32> to vector<32xf32>
    %145 = vector.shape_cast %144 : vector<32xf32> to vector<32x1xf32>
    %146 = math.sqrt %145 : vector<32x1xf32>
    %147 = arith.mulf %111, %146 : vector<32x1xf32>
    %148 = vector.shape_cast %147 : vector<32x1xf32> to vector<1x32x1xf32>
    %cst_43 = arith.constant dense<0.000000e+00> : vector<1xf32>
    %149 = vector.multi_reduction <add>, %148, %cst_43 [1, 2] : vector<1x32x1xf32> to vector<1xf32>
    %150 = vector.shape_cast %149 : vector<1xf32> to vector<1x1x1xf32>
    %151 = vector.extract %150[0, 0, 0] : f32 from vector<1x1x1xf32>
    %152 = vector.broadcast %151 : f32 to vector<1x1xf32>
    %153 = arith.mulf %1, %1 : vector<32x128xf32>
    %cst_44 = arith.constant dense<0.000000e+00> : vector<32xf32>
    %154 = vector.multi_reduction <add>, %153, %cst_44 [1] : vector<32x128xf32> to vector<32xf32>
    %155 = vector.shape_cast %154 : vector<32xf32> to vector<32x1xf32>
    %156 = math.sqrt %155 : vector<32x1xf32>
    %157 = arith.mulf %111, %156 : vector<32x1xf32>
    %158 = vector.shape_cast %157 : vector<32x1xf32> to vector<1x32x1xf32>
    %cst_45 = arith.constant dense<0.000000e+00> : vector<1xf32>
    %159 = vector.multi_reduction <add>, %158, %cst_45 [1, 2] : vector<1x32x1xf32> to vector<1xf32>
    %160 = vector.shape_cast %159 : vector<1xf32> to vector<1x1x1xf32>
    %161 = vector.extract %160[0, 0, 0] : f32 from vector<1x1x1xf32>
    %162 = vector.broadcast %161 : f32 to vector<1x1xf32>
    %163 = arith.addf %152, %162 : vector<1x1xf32>
    %cst_46 = arith.constant 0.00999999977 : f32
    %164 = vector.broadcast %cst_46 : f32 to vector<1x1xf32>
    %165 = arith.mulf %164, %163 : vector<1x1xf32>
    %166 = arith.addf %142, %165 : vector<1x1xf32>
    %167 = math.exp %2 : vector<32x128xf32>
    %168 = arith.mulf %167, %167 : vector<32x128xf32>
    %cst_47 = arith.constant dense<0.000000e+00> : vector<32xf32>
    %169 = vector.multi_reduction <add>, %168, %cst_47 [1] : vector<32x128xf32> to vector<32xf32>
    %170 = vector.shape_cast %169 : vector<32xf32> to vector<32x1xf32>
    %171 = math.sqrt %170 : vector<32x1xf32>
    %172 = arith.mulf %111, %171 : vector<32x1xf32>
    %173 = vector.shape_cast %172 : vector<32x1xf32> to vector<1x32x1xf32>
    %cst_48 = arith.constant dense<0.000000e+00> : vector<1xf32>
    %174 = vector.multi_reduction <add>, %173, %cst_48 [1, 2] : vector<1x32x1xf32> to vector<1xf32>
    %175 = vector.shape_cast %174 : vector<1xf32> to vector<1x1x1xf32>
    %176 = vector.extract %175[0, 0, 0] : f32 from vector<1x1x1xf32>
    %177 = vector.broadcast %176 : f32 to vector<1x1xf32>
    %178 = math.exp %3 : vector<32x128xf32>
    %179 = arith.mulf %178, %178 : vector<32x128xf32>
    %cst_49 = arith.constant dense<0.000000e+00> : vector<32xf32>
    %180 = vector.multi_reduction <add>, %179, %cst_49 [1] : vector<32x128xf32> to vector<32xf32>
    %181 = vector.shape_cast %180 : vector<32xf32> to vector<32x1xf32>
    %182 = math.sqrt %181 : vector<32x1xf32>
    %183 = arith.mulf %111, %182 : vector<32x1xf32>
    %184 = vector.shape_cast %183 : vector<32x1xf32> to vector<1x32x1xf32>
    %cst_50 = arith.constant dense<0.000000e+00> : vector<1xf32>
    %185 = vector.multi_reduction <add>, %184, %cst_50 [1, 2] : vector<1x32x1xf32> to vector<1xf32>
    %186 = vector.shape_cast %185 : vector<1xf32> to vector<1x1x1xf32>
    %187 = vector.extract %186[0, 0, 0] : f32 from vector<1x1x1xf32>
    %188 = vector.broadcast %187 : f32 to vector<1x1xf32>
    %189 = arith.addf %177, %188 : vector<1x1xf32>
    %cst_51 = arith.constant 0.00999999977 : f32
    %190 = vector.broadcast %cst_51 : f32 to vector<1x1xf32>
    %191 = arith.mulf %190, %189 : vector<1x1xf32>
    %192 = arith.addf %166, %191 : vector<1x1xf32>
    %193 = arith.mulf %9, %9 : vector<32x128xf32>
    %cst_52 = arith.constant dense<0.000000e+00> : vector<32xf32>
    %194 = vector.multi_reduction <add>, %193, %cst_52 [1] : vector<32x128xf32> to vector<32xf32>
    %195 = vector.shape_cast %194 : vector<32xf32> to vector<32x1xf32>
    %196 = math.sqrt %195 : vector<32x1xf32>
    %197 = arith.mulf %111, %196 : vector<32x1xf32>
    %198 = vector.shape_cast %197 : vector<32x1xf32> to vector<1x32x1xf32>
    %cst_53 = arith.constant dense<0.000000e+00> : vector<1xf32>
    %199 = vector.multi_reduction <add>, %198, %cst_53 [1, 2] : vector<1x32x1xf32> to vector<1xf32>
    %200 = vector.shape_cast %199 : vector<1xf32> to vector<1x1x1xf32>
    %201 = vector.extract %200[0, 0, 0] : f32 from vector<1x1x1xf32>
    %202 = vector.broadcast %201 : f32 to vector<1x1xf32>
    %203 = arith.mulf %11, %11 : vector<32x128xf32>
    %cst_54 = arith.constant dense<0.000000e+00> : vector<32xf32>
    %204 = vector.multi_reduction <add>, %203, %cst_54 [1] : vector<32x128xf32> to vector<32xf32>
    %205 = vector.shape_cast %204 : vector<32xf32> to vector<32x1xf32>
    %206 = math.sqrt %205 : vector<32x1xf32>
    %207 = arith.mulf %111, %206 : vector<32x1xf32>
    %208 = vector.shape_cast %207 : vector<32x1xf32> to vector<1x32x1xf32>
    %cst_55 = arith.constant dense<0.000000e+00> : vector<1xf32>
    %209 = vector.multi_reduction <add>, %208, %cst_55 [1, 2] : vector<1x32x1xf32> to vector<1xf32>
    %210 = vector.shape_cast %209 : vector<1xf32> to vector<1x1x1xf32>
    %211 = vector.extract %210[0, 0, 0] : f32 from vector<1x1x1xf32>
    %212 = vector.broadcast %211 : f32 to vector<1x1xf32>
    %213 = arith.addf %202, %212 : vector<1x1xf32>
    %cst_56 = arith.constant 0.00999999977 : f32
    %214 = vector.broadcast %cst_56 : f32 to vector<1x1xf32>
    %215 = arith.mulf %214, %213 : vector<1x1xf32>
    %216 = arith.addf %192, %215 : vector<1x1xf32>
    %217 = tpu.iota {dimensions = array<i32: 0>} : vector<8x128xi32>
    %c0_i32 = arith.constant 0 : i32
    %218 = vector.broadcast %c0_i32 : i32 to vector<8x128xi32>
    %219 = arith.cmpi eq, %217, %218 : vector<8x128xi32>
    %220 = vector.shape_cast %119 : vector<1x1xf32> to vector<1x1xf32>
    %221 = vector.broadcast %220 : vector<1x1xf32> to vector<8x128xf32>
    %222 = vector.shape_cast %216 : vector<1x1xf32> to vector<1x1xf32>
    %223 = vector.broadcast %222 : vector<1x1xf32> to vector<8x128xf32>
    %224 = arith.select %219, %221, %223 : vector<8x128xi1>, vector<8x128xf32>
    %c0_57 = arith.constant 0 : index
    %c0_58 = arith.constant 0 : index
    %225 = vector.load %arg10[%c0_57, %c0_58] : memref<8x128xf32, #tpu.memory_space<vmem>>, vector<8x128xf32>
    tpu.vector_store %arg10[%c0_57, %c0_58], %224 {strides = array<i32>} : memref<8x128xf32, #tpu.memory_space<vmem>>, vector<8x128xf32>,
    return
  }
  func.func @transform_0(%arg0: i32) -> (i32, i32) {
    %c0_i32 = arith.constant 0 : i32
    %c0_i32_0 = arith.constant 0 : i32
    return %arg0, %c0_i32 : i32, i32
  }
  func.func @transform_1(%arg0: i32) -> (i32, i32) {
    %c0_i32 = arith.constant 0 : i32
    %c0_i32_0 = arith.constant 0 : i32
    return %arg0, %c0_i32 : i32, i32
  }
  func.func @transform_2(%arg0: i32) -> (i32, i32) {
    %c0_i32 = arith.constant 0 : i32
    %c0_i32_0 = arith.constant 0 : i32
    return %arg0, %c0_i32 : i32, i32
  }
  func.func @transform_3(%arg0: i32) -> (i32, i32) {
    %c0_i32 = arith.constant 0 : i32
    %c0_i32_0 = arith.constant 0 : i32
    return %arg0, %c0_i32 : i32, i32
  }
  func.func @transform_4(%arg0: i32) -> (i32, i32) {
    %c0_i32 = arith.constant 0 : i32
    %c0_i32_0 = arith.constant 0 : i32
    return %arg0, %c0_i32 : i32, i32
  }
  func.func @transform_5(%arg0: i32) -> (i32, i32) {
    %c0_i32 = arith.constant 0 : i32
    %c0_i32_0 = arith.constant 0 : i32
    return %arg0, %c0_i32 : i32, i32
  }
  func.func @transform_6(%arg0: i32) -> (i32, i32) {
    %c0_i32 = arith.constant 0 : i32
    %c0_i32_0 = arith.constant 0 : i32
    return %arg0, %c0_i32 : i32, i32
  }
  func.func @transform_7(%arg0: i32) -> (i32, i32) {
    %c0_i32 = arith.constant 0 : i32
    %c0_i32_0 = arith.constant 0 : i32
    return %arg0, %c0_i32 : i32, i32
  }
  func.func @transform_8(%arg0: i32) -> (i32, i32) {
    %c0_i32 = arith.constant 0 : i32
    %c0_i32_0 = arith.constant 0 : i32
    return %arg0, %c0_i32 : i32, i32
  }
  func.func @transform_9(%arg0: i32) -> (i32, i32) {
    %c0_i32 = arith.constant 0 : i32
    %c0_i32_0 = arith.constant 0 : i32
    return %arg0, %c0_i32 : i32, i32
  }
}

</mosaic_0001>

<llo_original>
// kernel: tpu_custom_call.1
$region0: #{tpu_custom_call.1}
  #allocation0 [shape = 'u32[]', space=smem, size = 0x4, offset = 0x4, fixed_abs, tag = 'smem constant byte address 0x4 - core index']
  #allocation1 [shape = 'u32[144,128]{1,0:T(1,128)}', space=vmem, size = 0x12000, scoped, tag = 'internal scratch']
  %s0 = inlined_call_operand.vmem [shape: f32[32,128], index: 0, kind: input, shape index: {}]
  %s1 = inlined_call_operand.hbm [shape: f32[32,128], index: 1, kind: input, shape index: {}]
  %s2 = inlined_call_operand.hbm [shape: f32[32,128], index: 2, kind: input, shape index: {}]
  %s3 = inlined_call_operand.hbm [shape: f32[32,128], index: 3, kind: input, shape index: {}]
  %s4 = inlined_call_operand.hbm [shape: f32[32,128], index: 4, kind: input, shape index: {}]
  %s5 = inlined_call_operand.hbm [shape: f32[32,128], index: 5, kind: input, shape index: {}]
  %s6 = inlined_call_operand.hbm [shape: f32[32,128], index: 6, kind: input, shape index: {}]
  %s7 = inlined_call_operand.hbm [shape: f32[32,128], index: 7, kind: input, shape index: {}]
  %s8 = inlined_call_operand.vmem [shape: f32[32,3], index: 8, kind: input, shape index: {}]
  %s9 = inlined_call_operand.hbm [shape: f32[8,128], index: 9, kind: output, shape index: {}]
  %s10 = sld [smem:[#allocation0]]
  $region74: #{tpu_custom_call.1} parent=0
    _
  %s12 = ssub.s32 1, %s10
  %s13 = scalar_select 0, %s12, %s10
  $region1: #{tpu_custom_call.1} parent=0
    #allocation2 [shape = 'u8[16384]{0}', space=vmem, size = 0x4000, scoped, tag = 'input window, operand 1, single buffered']
    #allocation3 [shape = 's32[1]{0}', space=sflag, size = 0x4, scoped, tag = 'scoped memory for tpu_custom_call.1']
    #allocation4 [shape = 's32[1]{0}', space=sflag, size = 0x4, scoped, tag = 'scoped memory for tpu_custom_call.1']
    #allocation5 [shape = 'u8[16384]{0}', space=vmem, size = 0x4000, scoped, tag = 'input window, operand 2, single buffered']
    #allocation6 [shape = 's32[1]{0}', space=sflag, size = 0x4, scoped, tag = 'scoped memory for tpu_custom_call.1']
    #allocation7 [shape = 'u8[16384]{0}', space=vmem, size = 0x4000, scoped, tag = 'input window, operand 3, single buffered']
    #allocation8 [shape = 'u8[16384]{0}', space=vmem, size = 0x4000, scoped, tag = 'input window, operand 4, single buffered']
    #allocation9 [shape = 's32[1]{0}', space=sflag, size = 0x4, scoped, tag = 'scoped memory for tpu_custom_call.1']
    #allocation10 [shape = 'u8[16384]{0}', space=vmem, size = 0x4000, scoped, tag = 'input window, operand 5, single buffered']
    #allocation11 [shape = 'u8[16384]{0}', space=vmem, size = 0x4000, scoped, tag = 'input window, operand 6, single buffered']
    #allocation12 [shape = 's32[1]{0}', space=sflag, size = 0x4, scoped, tag = 'scoped memory for tpu_custom_call.1']
    #allocation13 [shape = 'u8[16384]{0}', space=vmem, size = 0x4000, scoped, tag = 'input window, operand 7, single buffered']
    #allocation14 [shape = 'u8[4096]{0}', space=vmem, size = 0x1000, scoped, tag = 'output window, operand 0, single buffered']
    %14 = vsyncpa [#allocation3], 0
    %15 = vsyncpa [#allocation6], 0
    %16 = vsyncpa [#allocation9], 0
    %17 = vsyncpa [#allocation12], 0
    %18 = vsyncpa [#allocation4], 0
    // Predicated region
    $region2: #{tpu_custom_call.1} parent=1 // pred_check
      _
    $region3: #{tpu_custom_call.1} parent=1 // pred_check_branch
      %20 = sbr.rel (0) target = $region5
    $region4: #{tpu_custom_call.1} parent=1 // pred_region
      _
    $region5: #{tpu_custom_call.1} parent=1 // pred_fallthru
      _
    // Predicated region
    $region6: #{tpu_custom_call.1} parent=1 // pred_check
      _
    $region7: #{tpu_custom_call.1} parent=1 // pred_check_branch
      %22 = sbr.rel (0) target = $region9
    $region8: #{tpu_custom_call.1} parent=1 // pred_region
      %s24 = ssub.s32 512, 512
      %25 = vsyncadd [#allocation3], %s24
      %s26 = sshll.u32 [#allocation2], 4
      %s27 = int_to_ptr.vmem [resolvable:$true] %s26
      %32 = dma.hbm_to_vmem [thread:$0]  %s1, 512, %s27, [#allocation3], 128, 128, 8
    $region9: #{tpu_custom_call.1} parent=1 // pred_fallthru
      _
    // Predicated region
    $region10: #{tpu_custom_call.1} parent=1 // pred_check
      _
    $region11: #{tpu_custom_call.1} parent=1 // pred_check_branch
      %34 = sbr.rel (0) target = $region13
    $region12: #{tpu_custom_call.1} parent=1 // pred_region
      %s36 = ssub.s32 512, 512
      %37 = vsyncadd [#allocation6], %s36
      %s38 = sshll.u32 [#allocation5], 4
      %s39 = int_to_ptr.vmem [resolvable:$true] %s38
      %44 = dma.hbm_to_vmem [thread:$0]  %s2, 512, %s39, [#allocation6], 128, 128, 8
    $region13: #{tpu_custom_call.1} parent=1 // pred_fallthru
      _
    // Predicated region
    $region14: #{tpu_custom_call.1} parent=1 // pred_check
      _
    $region15: #{tpu_custom_call.1} parent=1 // pred_check_branch
      %46 = sbr.rel (0) target = $region17
    $region16: #{tpu_custom_call.1} parent=1 // pred_region
      %s48 = ssub.s32 512, 512
      %49 = vsyncadd [#allocation6], %s48
      %s50 = sshll.u32 [#allocation7], 4
      %s51 = int_to_ptr.vmem [resolvable:$true] %s50
      %56 = dma.hbm_to_vmem [thread:$0]  %s3, 512, %s51, [#allocation6], 128, 128, 8
    $region17: #{tpu_custom_call.1} parent=1 // pred_fallthru
      _
    // Predicated region
    $region18: #{tpu_custom_call.1} parent=1 // pred_check
      _
    $region19: #{tpu_custom_call.1} parent=1 // pred_check_branch
      %58 = sbr.rel (0) target = $region21
    $region20: #{tpu_custom_call.1} parent=1 // pred_region
      %s60 = ssub.s32 512, 512
      %61 = vsyncadd [#allocation9], %s60
      %s62 = sshll.u32 [#allocation8], 4
      %s63 = int_to_ptr.vmem [resolvable:$true] %s62
      %68 = dma.hbm_to_vmem [thread:$0]  %s4, 512, %s63, [#allocation9], 128, 128, 8
    $region21: #{tpu_custom_call.1} parent=1 // pred_fallthru
      _
    // Predicated region
    $region22: #{tpu_custom_call.1} parent=1 // pred_check
      _
    $region23: #{tpu_custom_call.1} parent=1 // pred_check_branch
      %70 = sbr.rel (0) target = $region25
    $region24: #{tpu_custom_call.1} parent=1 // pred_region
      %s72 = ssub.s32 512, 512
      %73 = vsyncadd [#allocation9], %s72
      %s74 = sshll.u32 [#allocation10], 4
      %s75 = int_to_ptr.vmem [resolvable:$true] %s74
      %80 = dma.hbm_to_vmem [thread:$0]  %s5, 512, %s75, [#allocation9], 128, 128, 8
    $region25: #{tpu_custom_call.1} parent=1 // pred_fallthru
      _
    // Predicated region
    $region26: #{tpu_custom_call.1} parent=1 // pred_check
      _
    $region27: #{tpu_custom_call.1} parent=1 // pred_check_branch
      %82 = sbr.rel (0) target = $region29
    $region28: #{tpu_custom_call.1} parent=1 // pred_region
      %s84 = ssub.s32 512, 512
      %85 = vsyncadd [#allocation12], %s84
      %s86 = sshll.u32 [#allocation11], 4
      %s87 = int_to_ptr.vmem [resolvable:$true] %s86
      %92 = dma.hbm_to_vmem [thread:$0]  %s6, 512, %s87, [#allocation12], 128, 128, 8
    $region29: #{tpu_custom_call.1} parent=1 // pred_fallthru
      _
    // Predicated region
    $region30: #{tpu_custom_call.1} parent=1 // pred_check
      _
    $region31: #{tpu_custom_call.1} parent=1 // pred_check_branch
      %94 = sbr.rel (0) target = $region33
    $region32: #{tpu_custom_call.1} parent=1 // pred_region
      %s96 = ssub.s32 512, 512
      %97 = vsyncadd [#allocation12], %s96
      %s98 = sshll.u32 [#allocation13], 4
      %s99 = int_to_ptr.vmem [resolvable:$true] %s98
      %104 = dma.hbm_to_vmem [thread:$0]  %s7, 512, %s99, [#allocation12], 128, 128, 8
    $region33: #{tpu_custom_call.1} parent=1 // pred_fallthru
      _
    // Predicated region
    $region34: #{tpu_custom_call.1} parent=1 // pred_check
      _
    $region35: #{tpu_custom_call.1} parent=1 // pred_check_branch
      %106 = sbr.rel (0) target = $region37
    $region36: #{tpu_custom_call.1} parent=1 // pred_region
      _
    $region37: #{tpu_custom_call.1} parent=1 // pred_fallthru
      _
    // Predicated region
    $region38: #{tpu_custom_call.1} parent=1 // pred_check
      _
    $region39: #{tpu_custom_call.1} parent=1 // pred_check_branch
      %108 = sbr.rel (0) target = $region41
    $region40: #{tpu_custom_call.1} parent=1 // pred_region
      %109 = dma.done [#allocation3], 512
    $region41: #{tpu_custom_call.1} parent=1 // pred_fallthru
      _
    // Predicated region
    $region42: #{tpu_custom_call.1} parent=1 // pred_check
      _
    $region43: #{tpu_custom_call.1} parent=1 // pred_check_branch
      %111 = sbr.rel (0) target = $region45
    $region44: #{tpu_custom_call.1} parent=1 // pred_region
      %112 = dma.done [#allocation6], 512
    $region45: #{tpu_custom_call.1} parent=1 // pred_fallthru
      _
    // Predicated region
    $region46: #{tpu_custom_call.1} parent=1 // pred_check
      _
    $region47: #{tpu_custom_call.1} parent=1 // pred_check_branch
      %114 = sbr.rel (0) target = $region49
    $region48: #{tpu_custom_call.1} parent=1 // pred_region
      %115 = dma.done [#allocation6], 512
    $region49: #{tpu_custom_call.1} parent=1 // pred_fallthru
      _
    // Predicated region
    $region50: #{tpu_custom_call.1} parent=1 // pred_check
      _
    $region51: #{tpu_custom_call.1} parent=1 // pred_check_branch
      %117 = sbr.rel (0) target = $region53
    $region52: #{tpu_custom_call.1} parent=1 // pred_region
      %118 = dma.done [#allocation9], 512
    $region53: #{tpu_custom_call.1} parent=1 // pred_fallthru
      _
    // Predicated region
    $region54: #{tpu_custom_call.1} parent=1 // pred_check
      _
    $region55: #{tpu_custom_call.1} parent=1 // pred_check_branch
      %120 = sbr.rel (0) target = $region57
    $region56: #{tpu_custom_call.1} parent=1 // pred_region
      %121 = dma.done [#allocation9], 512
    $region57: #{tpu_custom_call.1} parent=1 // pred_fallthru
      _
    // Predicated region
    $region58: #{tpu_custom_call.1} parent=1 // pred_check
      _
    $region59: #{tpu_custom_call.1} parent=1 // pred_check_branch
      %123 = sbr.rel (0) target = $region61
    $region60: #{tpu_custom_call.1} parent=1 // pred_region
      %124 = dma.done [#allocation12], 512
    $region61: #{tpu_custom_call.1} parent=1 // pred_fallthru
      _
    // Predicated region
    $region62: #{tpu_custom_call.1} parent=1 // pred_check
      _
    $region63: #{tpu_custom_call.1} parent=1 // pred_check_branch
      %126 = sbr.rel (0) target = $region65
    $region64: #{tpu_custom_call.1} parent=1 // pred_region
      %127 = dma.done [#allocation12], 512
    $region65: #{tpu_custom_call.1} parent=1 // pred_fallthru
      _
    %v128 = vld [vmem:[%s0] sm:$0xff]
    %v129 = vld [vmem:[%s0 + $0x8] sm:$0xff]
    %v130 = vld [vmem:[%s0 + $0x10] sm:$0xff]
    %v131 = vld [vmem:[%s0 + $0x18] sm:$0xff]
    %v132 = vld [vmem:[#allocation5] sm:$0xff]
    %v133 = vld [vmem:[#allocation5 + $0x8] sm:$0xff]
    %v134 = vld [vmem:[#allocation5 + $0x10] sm:$0xff]
    %v135 = vld [vmem:[#allocation5 + $0x18] sm:$0xff]
    %v136 = vld [vmem:[#allocation8] sm:$0xff]
    %v137 = vld [vmem:[#allocation8 + $0x8] sm:$0xff]
    %v138 = vld [vmem:[#allocation8 + $0x10] sm:$0xff]
    %v139 = vld [vmem:[#allocation8 + $0x18] sm:$0xff]
    %v140 = vld [vmem:[#allocation11] sm:$0xff]
    %v141 = vld [vmem:[#allocation11 + $0x8] sm:$0xff]
    %v142 = vld [vmem:[#allocation11 + $0x10] sm:$0xff]
    %v143 = vld [vmem:[#allocation11 + $0x18] sm:$0xff]
    %v144 = vld [vmem:[#allocation2] sm:$0xff]
    %v145 = vld [vmem:[#allocation2 + $0x8] sm:$0xff]
    %v146 = vld [vmem:[#allocation2 + $0x10] sm:$0xff]
    %v147 = vld [vmem:[#allocation2 + $0x18] sm:$0xff]
    %v148 = vmul.f32 %v144, 1.442695
    %v149 = vpow.pop %v148
    %v150 = vmul.f32 %v145, 1.442695
    %v151 = vpow.pop %v150
    %v152 = vmul.f32 %v146, 1.442695
    %v153 = vpow.pop %v152
    %v154 = vmul.f32 %v147, 1.442695
    %v155 = vpow.pop %v154
    %v156 = vld [vmem:[#allocation7] sm:$0xff]
    %v157 = vld [vmem:[#allocation7 + $0x8] sm:$0xff]
    %v158 = vld [vmem:[#allocation7 + $0x10] sm:$0xff]
    %v159 = vld [vmem:[#allocation7 + $0x18] sm:$0xff]
    %v160 = vmul.f32 %v156, 1.442695
    %v161 = vpow.pop %v160
    %v162 = vmul.f32 %v157, 1.442695
    %v163 = vpow.pop %v162
    %v164 = vmul.f32 %v158, 1.442695
    %v165 = vpow.pop %v164
    %v166 = vmul.f32 %v159, 1.442695
    %v167 = vpow.pop %v166
    %v168 = vld [vmem:[#allocation10] sm:$0xff]
    %v169 = vld [vmem:[#allocation10 + $0x8] sm:$0xff]
    %v170 = vld [vmem:[#allocation10 + $0x10] sm:$0xff]
    %v171 = vld [vmem:[#allocation10 + $0x18] sm:$0xff]
    %v172 = vmul.f32 %v168, 1.442695
    %v173 = vpow.pop %v172
    %v174 = vmul.f32 %v169, 1.442695
    %v175 = vpow.pop %v174
    %v176 = vmul.f32 %v170, 1.442695
    %v177 = vpow.pop %v176
    %v178 = vmul.f32 %v171, 1.442695
    %v179 = vpow.pop %v178
    %v180 = vld [vmem:[#allocation13] sm:$0xff]
    %v181 = vld [vmem:[#allocation13 + $0x8] sm:$0xff]
    %v182 = vld [vmem:[#allocation13 + $0x10] sm:$0xff]
    %v183 = vld [vmem:[#allocation13 + $0x18] sm:$0xff]
    %v184 = vmul.f32 %v180, 1.442695
    %v185 = vpow.pop %v184
    %v186 = vmul.f32 %v181, 1.442695
    %v187 = vpow.pop %v186
    %v188 = vmul.f32 %v182, 1.442695
    %v189 = vpow.pop %v188
    %v190 = vmul.f32 %v183, 1.442695
    %v191 = vpow.pop %v190
    %v192 = vmul.f32 %v128, %v173
    %v193 = vmul.f32 %v129, %v175
    %v194 = vmul.f32 %v130, %v177
    %v195 = vmul.f32 %v131, %v179
    %v196 = vadd.f32 %v192, %v136
    %v197 = vadd.f32 %v193, %v137
    %v198 = vadd.f32 %v194, %v138
    %v199 = vadd.f32 %v195, %v139
    %v200 = vmul.f32 %v149, %v173
    %v201 = vmul.f32 %v151, %v175
    %v202 = vmul.f32 %v153, %v177
    %v203 = vmul.f32 %v155, %v179
    %v204 = vadd.f32 %v196, %v200
    %v205 = vadd.f32 %v197, %v201
    %v206 = vadd.f32 %v198, %v202
    %v207 = vadd.f32 %v199, %v203
    %v208 = vmul.f32 %v132, %v185
    %v209 = vmul.f32 %v133, %v187
    %v210 = vmul.f32 %v134, %v189
    %v211 = vmul.f32 %v135, %v191
    %v212 = vadd.f32 %v208, %v140
    %v213 = vadd.f32 %v209, %v141
    %v214 = vadd.f32 %v210, %v142
    %v215 = vadd.f32 %v211, %v143
    %v216 = vmul.f32 %v161, %v185
    %v217 = vmul.f32 %v163, %v187
    %v218 = vmul.f32 %v165, %v189
    %v219 = vmul.f32 %v167, %v191
    %v220 = vadd.f32 %v212, %v216
    %v221 = vadd.f32 %v213, %v217
    %v222 = vadd.f32 %v214, %v218
    %v223 = vadd.f32 %v215, %v219
    %v224 = vmul.f32 %v196, 10.0
    %v225 = vmul.f32 %v197, 10.0
    %v226 = vmul.f32 %v198, 10.0
    %v227 = vmul.f32 %v199, 10.0
    %v228 = vmul.f32 %v212, 10.0
    %v229 = vmul.f32 %v213, 10.0
    %v230 = vmul.f32 %v214, 10.0
    %v231 = vmul.f32 %v215, 10.0
    %v232 = vmax.f32 %v224, %v228
    %v233 = vmax.f32 %v225, %v229
    %v234 = vmax.f32 %v226, %v230
    %v235 = vmax.f32 %v227, %v231
    %v236 = vsub.f32 %v224, %v228
    %v237 = vsub.f32 %v225, %v229
    %v238 = vsub.f32 %v226, %v230
    %v239 = vsub.f32 %v227, %v231
    %vm240 = vcmp.ne.f32.partialorder %v236, %v236
    %vm241 = vcmp.ne.f32.partialorder %v237, %v237
    %vm242 = vcmp.ne.f32.partialorder %v238, %v238
    %vm243 = vcmp.ne.f32.partialorder %v239, %v239
    %v244 = vadd.f32 %v224, %v228
    %v245 = vadd.f32 %v225, %v229
    %v246 = vadd.f32 %v226, %v230
    %v247 = vadd.f32 %v227, %v231
    %v248 = vand.u32 2147483647, %v236
    %v249 = vand.u32 2147483647, %v237
    %v250 = vand.u32 2147483647, %v238
    %v251 = vand.u32 2147483647, %v239
    %v252 = vsub.f32 0.0, %v248
    %v253 = vsub.f32 0.0, %v249
    %v254 = vsub.f32 0.0, %v250
    %v255 = vsub.f32 0.0, %v251
    %v256 = vmul.f32 %v252, 1.442695
    %v257 = vpow.pop %v256
    %v258 = vmul.f32 %v253, 1.442695
    %v259 = vpow.pop %v258
    %v260 = vmul.f32 %v254, 1.442695
    %v261 = vpow.pop %v260
    %v262 = vmul.f32 %v255, 1.442695
    %v263 = vpow.pop %v262
    %v264 = vadd.f32 %v257, 1.0
    %v265 = vlog2.pop %v264
    %v266 = vmul.f32 %v265, 0.6931472
    %v267 = vmul.f32 -0.5, %v257
    %v268 = vadd.f32 %v267, 1.0
    %v269 = vmul.f32 %v268, %v257
    %v270 = vand.u32 2147483647, %v257
    %vm271 = vcmp.lt.f32.partialorder %v270, 0.0004427343
    %v272 = vsel %vm271, %v269, %v266
    %v273 = vadd.f32 %v259, 1.0
    %v274 = vlog2.pop %v273
    %v275 = vmul.f32 %v274, 0.6931472
    %v276 = vmul.f32 -0.5, %v259
    %v277 = vadd.f32 %v276, 1.0
    %v278 = vmul.f32 %v277, %v259
    %v279 = vand.u32 2147483647, %v259
    %vm280 = vcmp.lt.f32.partialorder %v279, 0.0004427343
    %v281 = vsel %vm280, %v278, %v275
    %v282 = vadd.f32 %v261, 1.0
    %v283 = vlog2.pop %v282
    %v284 = vmul.f32 %v283, 0.6931472
    %v285 = vmul.f32 -0.5, %v261
    %v286 = vadd.f32 %v285, 1.0
    %v287 = vmul.f32 %v286, %v261
    %v288 = vand.u32 2147483647, %v261
    %vm289 = vcmp.lt.f32.partialorder %v288, 0.0004427343
    %v290 = vsel %vm289, %v287, %v284
    %v291 = vadd.f32 %v263, 1.0
    %v292 = vlog2.pop %v291
    %v293 = vmul.f32 %v292, 0.6931472
    %v294 = vmul.f32 -0.5, %v263
    %v295 = vadd.f32 %v294, 1.0
    %v296 = vmul.f32 %v295, %v263
    %v297 = vand.u32 2147483647, %v263
    %vm298 = vcmp.lt.f32.partialorder %v297, 0.0004427343
    %v299 = vsel %vm298, %v296, %v293
    %v300 = vadd.f32 %v232, %v272
    %v301 = vadd.f32 %v233, %v281
    %v302 = vadd.f32 %v234, %v290
    %v303 = vadd.f32 %v235, %v299
    %v304 = vsel %vm240, %v244, %v300
    %v305 = vsel %vm241, %v245, %v301
    %v306 = vsel %vm242, %v246, %v302
    %v307 = vsel %vm243, %v247, %v303
    %v308 = vmul.f32 %v304, 0.1
    %v309 = vmul.f32 %v305, 0.1
    %v310 = vmul.f32 %v306, 0.1
    %v311 = vmul.f32 %v307, 0.1
    %v312 = vmax.f32 %v196, %v212
    %v313 = vmax.f32 %v197, %v213
    %v314 = vmax.f32 %v198, %v214
    %v315 = vmax.f32 %v199, %v215
    %v316 = vmax.f32 %v308, %v312
    %v317 = vmax.f32 %v309, %v313
    %v318 = vmax.f32 %v310, %v314
    %v319 = vmax.f32 %v311, %v315
    %v320 = vsub.f32 0.0, %v204
    %v321 = vsub.f32 0.0, %v205
    %v322 = vsub.f32 0.0, %v206
    %v323 = vsub.f32 0.0, %v207
    %v324 = vmul.f32 %v320, 10.0
    %v325 = vmul.f32 %v321, 10.0
    %v326 = vmul.f32 %v322, 10.0
    %v327 = vmul.f32 %v323, 10.0
    %v328 = vsub.f32 0.0, %v220
    %v329 = vsub.f32 0.0, %v221
    %v330 = vsub.f32 0.0, %v222
    %v331 = vsub.f32 0.0, %v223
    %v332 = vmul.f32 %v328, 10.0
    %v333 = vmul.f32 %v329, 10.0
    %v334 = vmul.f32 %v330, 10.0
    %v335 = vmul.f32 %v331, 10.0
    %v336 = vmax.f32 %v324, %v332
    %v337 = vmax.f32 %v325, %v333
    %v338 = vmax.f32 %v326, %v334
    %v339 = vmax.f32 %v327, %v335
    %v340 = vsub.f32 %v324, %v332
    %v341 = vsub.f32 %v325, %v333
    %v342 = vsub.f32 %v326, %v334
    %v343 = vsub.f32 %v327, %v335
    %vm344 = vcmp.ne.f32.partialorder %v340, %v340
    %vm345 = vcmp.ne.f32.partialorder %v341, %v341
    %vm346 = vcmp.ne.f32.partialorder %v342, %v342
    %vm347 = vcmp.ne.f32.partialorder %v343, %v343
    %v348 = vadd.f32 %v324, %v332
    %v349 = vadd.f32 %v325, %v333
    %v350 = vadd.f32 %v326, %v334
    %v351 = vadd.f32 %v327, %v335
    %v352 = vand.u32 2147483647, %v340
    %v353 = vand.u32 2147483647, %v341
    %v354 = vand.u32 2147483647, %v342
    %v355 = vand.u32 2147483647, %v343
    %v356 = vsub.f32 0.0, %v352
    %v357 = vsub.f32 0.0, %v353
    %v358 = vsub.f32 0.0, %v354
    %v359 = vsub.f32 0.0, %v355
    %v360 = vmul.f32 %v356, 1.442695
    %v361 = vpow.pop %v360
    %v362 = vmul.f32 %v357, 1.442695
    %v363 = vpow.pop %v362
    %v364 = vmul.f32 %v358, 1.442695
    %v365 = vpow.pop %v364
    %v366 = vmul.f32 %v359, 1.442695
    %v367 = vpow.pop %v366
    %v368 = vadd.f32 %v361, 1.0
    %v369 = vlog2.pop %v368
    %v370 = vmul.f32 %v369, 0.6931472
    %v371 = vmul.f32 -0.5, %v361
    %v372 = vadd.f32 %v371, 1.0
    %v373 = vmul.f32 %v372, %v361
    %v374 = vand.u32 2147483647, %v361
    %vm375 = vcmp.lt.f32.partialorder %v374, 0.0004427343
    %v376 = vsel %vm375, %v373, %v370
    %v377 = vadd.f32 %v363, 1.0
    %v378 = vlog2.pop %v377
    %v379 = vmul.f32 %v378, 0.6931472
    %v380 = vmul.f32 -0.5, %v363
    %v381 = vadd.f32 %v380, 1.0
    %v382 = vmul.f32 %v381, %v363
    %v383 = vand.u32 2147483647, %v363
    %vm384 = vcmp.lt.f32.partialorder %v383, 0.0004427343
    %v385 = vsel %vm384, %v382, %v379
    %v386 = vadd.f32 %v365, 1.0
    %v387 = vlog2.pop %v386
    %v388 = vmul.f32 %v387, 0.6931472
    %v389 = vmul.f32 -0.5, %v365
    %v390 = vadd.f32 %v389, 1.0
    %v391 = vmul.f32 %v390, %v365
    %v392 = vand.u32 2147483647, %v365
    %vm393 = vcmp.lt.f32.partialorder %v392, 0.0004427343
    %v394 = vsel %vm393, %v391, %v388
    %v395 = vadd.f32 %v367, 1.0
    %v396 = vlog2.pop %v395
    %v397 = vmul.f32 %v396, 0.6931472
    %v398 = vmul.f32 -0.5, %v367
    %v399 = vadd.f32 %v398, 1.0
    %v400 = vmul.f32 %v399, %v367
    %v401 = vand.u32 2147483647, %v367
    %vm402 = vcmp.lt.f32.partialorder %v401, 0.0004427343
    %v403 = vsel %vm402, %v400, %v397
    %v404 = vadd.f32 %v336, %v376
    %v405 = vadd.f32 %v337, %v385
    %v406 = vadd.f32 %v338, %v394
    %v407 = vadd.f32 %v339, %v403
    %v408 = vsel %vm344, %v348, %v404
    %v409 = vsel %vm345, %v349, %v405
    %v410 = vsel %vm346, %v350, %v406
    %v411 = vsel %vm347, %v351, %v407
    %v412 = vmul.f32 %v408, -0.1
    %v413 = vmul.f32 %v409, -0.1
    %v414 = vmul.f32 %v410, -0.1
    %v415 = vmul.f32 %v411, -0.1
    %v416 = vmin.f32 %v204, %v220
    %v417 = vmin.f32 %v205, %v221
    %v418 = vmin.f32 %v206, %v222
    %v419 = vmin.f32 %v207, %v223
    %v420 = vmin.f32 %v412, %v416
    %v421 = vmin.f32 %v413, %v417
    %v422 = vmin.f32 %v414, %v418
    %v423 = vmin.f32 %v415, %v419
    %v424 = vsub.f32 %v420, %v316
    %v425 = vsub.f32 %v421, %v317
    %v426 = vsub.f32 %v422, %v318
    %v427 = vsub.f32 %v423, %v319
    %v428 = vsub.f32 %v424, 0.11544313
    %v429 = vsub.f32 %v425, 0.11544313
    %v430 = vsub.f32 %v426, 0.11544313
    %v431 = vsub.f32 %v427, 0.11544313
    %v432 = vmax.f32 %v428, 0.0
    %v433 = vmax.f32 %v429, 0.0
    %v434 = vmax.f32 %v430, 0.0
    %v435 = vmax.f32 %v431, 0.0
    %vm436 = vcmp.ne.f32.partialorder %v428, %v428
    %vm437 = vcmp.ne.f32.partialorder %v429, %v429
    %vm438 = vcmp.ne.f32.partialorder %v430, %v430
    %vm439 = vcmp.ne.f32.partialorder %v431, %v431
    %v440 = vadd.f32 %v428, 0.0
    %v441 = vadd.f32 %v429, 0.0
    %v442 = vadd.f32 %v430, 0.0
    %v443 = vadd.f32 %v431, 0.0
    %v444 = vand.u32 2147483647, %v428
    %v445 = vand.u32 2147483647, %v429
    %v446 = vand.u32 2147483647, %v430
    %v447 = vand.u32 2147483647, %v431
    %v448 = vsub.f32 0.0, %v444
    %v449 = vsub.f32 0.0, %v445
    %v450 = vsub.f32 0.0, %v446
    %v451 = vsub.f32 0.0, %v447
    %v452 = vmul.f32 %v448, 1.442695
    %v453 = vpow.pop %v452
    %v454 = vmul.f32 %v449, 1.442695
    %v455 = vpow.pop %v454
    %v456 = vmul.f32 %v450, 1.442695
    %v457 = vpow.pop %v456
    %v458 = vmul.f32 %v451, 1.442695
    %v459 = vpow.pop %v458
    %v460 = vadd.f32 %v453, 1.0
    %v461 = vlog2.pop %v460
    %v462 = vmul.f32 %v461, 0.6931472
    %v463 = vmul.f32 -0.5, %v453
    %v464 = vadd.f32 %v463, 1.0
    %v465 = vmul.f32 %v464, %v453
    %v466 = vand.u32 2147483647, %v453
    %vm467 = vcmp.lt.f32.partialorder %v466, 0.0004427343
    %v468 = vsel %vm467, %v465, %v462
    %v469 = vadd.f32 %v455, 1.0
    %v470 = vlog2.pop %v469
    %v471 = vmul.f32 %v470, 0.6931472
    %v472 = vmul.f32 -0.5, %v455
    %v473 = vadd.f32 %v472, 1.0
    %v474 = vmul.f32 %v473, %v455
    %v475 = vand.u32 2147483647, %v455
    %vm476 = vcmp.lt.f32.partialorder %v475, 0.0004427343
    %v477 = vsel %vm476, %v474, %v471
    %v478 = vadd.f32 %v457, 1.0
    %v479 = vlog2.pop %v478
    %v480 = vmul.f32 %v479, 0.6931472
    %v481 = vmul.f32 -0.5, %v457
    %v482 = vadd.f32 %v481, 1.0
    %v483 = vmul.f32 %v482, %v457
    %v484 = vand.u32 2147483647, %v457
    %vm485 = vcmp.lt.f32.partialorder %v484, 0.0004427343
    %v486 = vsel %vm485, %v483, %v480
    %v487 = vadd.f32 %v459, 1.0
    %v488 = vlog2.pop %v487
    %v489 = vmul.f32 %v488, 0.6931472
    %v490 = vmul.f32 -0.5, %v459
    %v491 = vadd.f32 %v490, 1.0
    %v492 = vmul.f32 %v491, %v459
    %v493 = vand.u32 2147483647, %v459
    %vm494 = vcmp.lt.f32.partialorder %v493, 0.0004427343
    %v495 = vsel %vm494, %v492, %v489
    %v496 = vadd.f32 %v432, %v468
    %v497 = vadd.f32 %v433, %v477
    %v498 = vadd.f32 %v434, %v486
    %v499 = vadd.f32 %v435, %v495
    %v500 = vsel %vm436, %v440, %v496
    %v501 = vsel %vm437, %v441, %v497
    %v502 = vsel %vm438, %v442, %v498
    %v503 = vsel %vm439, %v443, %v499
    %v504 = vmax.f32 %v500, 1.1754944e-38
    %v505 = vmax.f32 %v501, 1.1754944e-38
    %v506 = vmax.f32 %v502, 1.1754944e-38
    %v507 = vmax.f32 %v503, 1.1754944e-38
    %v508 = vlog2.pop %v504
    %v509 = vmul.f32 %v508, 0.6931472
    %v510 = vlog2.pop %v505
    %v511 = vmul.f32 %v510, 0.6931472
    %v512 = vlog2.pop %v506
    %v513 = vmul.f32 %v512, 0.6931472
    %v514 = vlog2.pop %v507
    %v515 = vmul.f32 %v514, 0.6931472
    %516 = vadd.xlane.f32.xlu0 %v509
    %v517 = vpop.xlane.xlu0 %516
    %518 = vadd.xlane.f32.xlu0 %v511
    %v519 = vpop.xlane.xlu0 %518
    %520 = vadd.xlane.f32.xlu0 %v513
    %v521 = vpop.xlane.xlu0 %520
    %522 = vadd.xlane.f32.xlu0 %v515
    %v523 = vpop.xlane.xlu0 %522
    %v524 = vsub.f32 %v220, %v212
    %v525 = vsub.f32 %v221, %v213
    %v526 = vsub.f32 %v222, %v214
    %v527 = vsub.f32 %v223, %v215
    %v528 = vsub.f32 %v524, 0.11544313
    %v529 = vsub.f32 %v525, 0.11544313
    %v530 = vsub.f32 %v526, 0.11544313
    %v531 = vsub.f32 %v527, 0.11544313
    %v532 = vmax.f32 %v528, 0.0
    %v533 = vmax.f32 %v529, 0.0
    %v534 = vmax.f32 %v530, 0.0
    %v535 = vmax.f32 %v531, 0.0
    %vm536 = vcmp.ne.f32.partialorder %v528, %v528
    %vm537 = vcmp.ne.f32.partialorder %v529, %v529
    %vm538 = vcmp.ne.f32.partialorder %v530, %v530
    %vm539 = vcmp.ne.f32.partialorder %v531, %v531
    %v540 = vadd.f32 %v528, 0.0
    %v541 = vadd.f32 %v529, 0.0
    %v542 = vadd.f32 %v530, 0.0
    %v543 = vadd.f32 %v531, 0.0
    %v544 = vand.u32 2147483647, %v528
    %v545 = vand.u32 2147483647, %v529
    %v546 = vand.u32 2147483647, %v530
    %v547 = vand.u32 2147483647, %v531
    %v548 = vsub.f32 0.0, %v544
    %v549 = vsub.f32 0.0, %v545
    %v550 = vsub.f32 0.0, %v546
    %v551 = vsub.f32 0.0, %v547
    %v552 = vmul.f32 %v548, 1.442695
    %v553 = vpow.pop %v552
    %v554 = vmul.f32 %v549, 1.442695
    %v555 = vpow.pop %v554
    %v556 = vmul.f32 %v550, 1.442695
    %v557 = vpow.pop %v556
    %v558 = vmul.f32 %v551, 1.442695
    %v559 = vpow.pop %v558
    %v560 = vadd.f32 %v553, 1.0
    %v561 = vlog2.pop %v560
    %v562 = vmul.f32 %v561, 0.6931472
    %v563 = vmul.f32 -0.5, %v553
    %v564 = vadd.f32 %v563, 1.0
    %v565 = vmul.f32 %v564, %v553
    %v566 = vand.u32 2147483647, %v553
    %vm567 = vcmp.lt.f32.partialorder %v566, 0.0004427343
    %v568 = vsel %vm567, %v565, %v562
    %v569 = vadd.f32 %v555, 1.0
    %v570 = vlog2.pop %v569
    %v571 = vmul.f32 %v570, 0.6931472
    %v572 = vmul.f32 -0.5, %v555
    %v573 = vadd.f32 %v572, 1.0
    %v574 = vmul.f32 %v573, %v555
    %v575 = vand.u32 2147483647, %v555
    %vm576 = vcmp.lt.f32.partialorder %v575, 0.0004427343
    %v577 = vsel %vm576, %v574, %v571
    %v578 = vadd.f32 %v557, 1.0
    %v579 = vlog2.pop %v578
    %v580 = vmul.f32 %v579, 0.6931472
    %v581 = vmul.f32 -0.5, %v557
    %v582 = vadd.f32 %v581, 1.0
    %v583 = vmul.f32 %v582, %v557
    %v584 = vand.u32 2147483647, %v557
    %vm585 = vcmp.lt.f32.partialorder %v584, 0.0004427343
    %v586 = vsel %vm585, %v583, %v580
    %v587 = vadd.f32 %v559, 1.0
    %v588 = vlog2.pop %v587
    %v589 = vmul.f32 %v588, 0.6931472
    %v590 = vmul.f32 -0.5, %v559
    %v591 = vadd.f32 %v590, 1.0
    %v592 = vmul.f32 %v591, %v559
    %v593 = vand.u32 2147483647, %v559
    %vm594 = vcmp.lt.f32.partialorder %v593, 0.0004427343
    %v595 = vsel %vm594, %v592, %v589
    %v596 = vadd.f32 %v532, %v568
    %v597 = vadd.f32 %v533, %v577
    %v598 = vadd.f32 %v534, %v586
    %v599 = vadd.f32 %v535, %v595
    %v600 = vsel %vm536, %v540, %v596
    %v601 = vsel %vm537, %v541, %v597
    %v602 = vsel %vm538, %v542, %v598
    %v603 = vsel %vm539, %v543, %v599
    %v604 = vmax.f32 %v600, 1.1754944e-38
    %v605 = vmax.f32 %v601, 1.1754944e-38
    %v606 = vmax.f32 %v602, 1.1754944e-38
    %v607 = vmax.f32 %v603, 1.1754944e-38
    %v608 = vlog2.pop %v604
    %v609 = vmul.f32 %v608, 0.6931472
    %v610 = vlog2.pop %v605
    %v611 = vmul.f32 %v610, 0.6931472
    %v612 = vlog2.pop %v606
    %v613 = vmul.f32 %v612, 0.6931472
    %v614 = vlog2.pop %v607
    %v615 = vmul.f32 %v614, 0.6931472
    %616 = vadd.xlane.f32.xlu0 %v609
    %v617 = vpop.xlane.xlu0 %616
    %618 = vadd.xlane.f32.xlu0 %v611
    %v619 = vpop.xlane.xlu0 %618
    %620 = vadd.xlane.f32.xlu0 %v613
    %v621 = vpop.xlane.xlu0 %620
    %622 = vadd.xlane.f32.xlu0 %v615
    %v623 = vpop.xlane.xlu0 %622
    %v624 = vsub.f32 %v517, %v617
    %v625 = vsub.f32 %v519, %v619
    %v626 = vsub.f32 %v521, %v621
    %v627 = vsub.f32 %v523, %v623
    %v628 = vmul.f32 %v624, 1.442695
    %v629 = vpow.pop %v628
    %v630 = vmul.f32 %v625, 1.442695
    %v631 = vpow.pop %v630
    %v632 = vmul.f32 %v626, 1.442695
    %v633 = vpow.pop %v632
    %v634 = vmul.f32 %v627, 1.442695
    %v635 = vpow.pop %v634
    %v636 = vld [vmem:[%s8] sm:$0xff]
    %v637 = vld [vmem:[%s8 + $0x8] sm:$0xff]
    %v638 = vld [vmem:[%s8 + $0x10] sm:$0xff]
    %v639 = vld [vmem:[%s8 + $0x18] sm:$0xff]
    %v640 = vsub.f32 %v629, %v636
    %v641 = vsub.f32 %v631, %v637
    %v642 = vsub.f32 %v633, %v638
    %v643 = vsub.f32 %v635, %v639
    %648 = vrot.lane.b32.xlu0 %v640, 1
    %v649 = vpop.permute.xlu0 %648
    %650 = vrot.lane.b32.xlu0 %v641, 1
    %v651 = vpop.permute.xlu0 %650
    %652 = vrot.lane.b32.xlu0 %v642, 1
    %v653 = vpop.permute.xlu0 %652
    %654 = vrot.lane.b32.xlu0 %v643, 1
    %v655 = vpop.permute.xlu0 %654
    %v660 = vmul.f32 %v636, %v649
    %v661 = vmul.f32 %v637, %v651
    %v662 = vmul.f32 %v638, %v653
    %v663 = vmul.f32 %v639, %v655
    %v664 = vmul.f32 %v660, %v649
    %v665 = vmul.f32 %v661, %v651
    %v666 = vmul.f32 %v662, %v653
    %v667 = vmul.f32 %v663, %v655
    %672 = vrot.lane.b32.xlu0 %v664, 127
    %v673 = vpop.permute.xlu0 %672
    %674 = vrot.lane.b32.xlu0 %v665, 127
    %v675 = vpop.permute.xlu0 %674
    %676 = vrot.lane.b32.xlu0 %v666, 127
    %v677 = vpop.permute.xlu0 %676
    %678 = vrot.lane.b32.xlu0 %v667, 127
    %v679 = vpop.permute.xlu0 %678
    %vm684 = vcmask 7168
    %v685 = vsel %vm684, %v673, 0.0
    %v686 = vsel %vm684, %v675, 0.0
    %v687 = vadd.f32 %v685, %v686
    %v688 = vsel %vm684, %v677, 0.0
    %v689 = vadd.f32 %v687, %v688
    %v690 = vsel %vm684, %v679, 0.0
    %v691 = vadd.f32 %v689, %v690
    %692 = vadd.xlane.f32.xlu0 %v691
    %v693 = vpop.xlane.xlu0 %692
    %v694 = vrot.slane %v693, 4
    %v695 = vadd.f32 %v693, %v694
    %v696 = vrot.slane %v695, 2
    %v697 = vadd.f32 %v695, %v696
    %v698 = vrot.slane %v697, 1
    %v699 = vadd.f32 %v697, %v698
    %s700 = vtos %v699
    %v701 = vmul.f32 %v149, %v149
    %v702 = vmul.f32 %v151, %v151
    %v703 = vmul.f32 %v153, %v153
    %v704 = vmul.f32 %v155, %v155
    %705 = vadd.xlane.f32.xlu0 %v701
    %v706 = vpop.xlane.xlu0 %705
    %707 = vadd.xlane.f32.xlu0 %v702
    %v708 = vpop.xlane.xlu0 %707
    %709 = vadd.xlane.f32.xlu0 %v703
    %v710 = vpop.xlane.xlu0 %709
    %711 = vadd.xlane.f32.xlu0 %v704
    %v712 = vpop.xlane.xlu0 %711
    %v713 = vrsqrt.pop %v706
    %v714 = vmul.f32 %v706, %v713
    %vm715 = vcmp.eq.f32.partialorder %v706, inf
    %v716 = vsel %vm715, %v706, %v714
    %vm717 = vcmp.eq.f32.partialorder %v706, 0.0
    %v718 = vand.u32 %v706, 2147483648
    %v719 = vsel %vm717, %v718, %v716
    %v720 = vrsqrt.pop %v708
    %v721 = vmul.f32 %v708, %v720
    %vm722 = vcmp.eq.f32.partialorder %v708, inf
    %v723 = vsel %vm722, %v708, %v721
    %vm724 = vcmp.eq.f32.partialorder %v708, 0.0
    %v725 = vand.u32 %v708, 2147483648
    %v726 = vsel %vm724, %v725, %v723
    %v727 = vrsqrt.pop %v710
    %v728 = vmul.f32 %v710, %v727
    %vm729 = vcmp.eq.f32.partialorder %v710, inf
    %v730 = vsel %vm729, %v710, %v728
    %vm731 = vcmp.eq.f32.partialorder %v710, 0.0
    %v732 = vand.u32 %v710, 2147483648
    %v733 = vsel %vm731, %v732, %v730
    %v734 = vrsqrt.pop %v712
    %v735 = vmul.f32 %v712, %v734
    %vm736 = vcmp.eq.f32.partialorder %v712, inf
    %v737 = vsel %vm736, %v712, %v735
    %vm738 = vcmp.eq.f32.partialorder %v712, 0.0
    %v739 = vand.u32 %v712, 2147483648
    %v740 = vsel %vm738, %v739, %v737
    %v741 = vmul.f32 %v636, %v719
    %v742 = vmul.f32 %v637, %v726
    %v743 = vmul.f32 %v638, %v733
    %v744 = vmul.f32 %v639, %v740
    %749 = vrot.lane.b32.xlu0 %v741, 126
    %v750 = vpop.permute.xlu0 %749
    %751 = vrot.lane.b32.xlu0 %v742, 126
    %v752 = vpop.permute.xlu0 %751
    %753 = vrot.lane.b32.xlu0 %v743, 126
    %v754 = vpop.permute.xlu0 %753
    %755 = vrot.lane.b32.xlu0 %v744, 126
    %v756 = vpop.permute.xlu0 %755
    %v761 = vsel %vm684, %v750, 0.0
    %v762 = vsel %vm684, %v752, 0.0
    %v763 = vadd.f32 %v761, %v762
    %v764 = vsel %vm684, %v754, 0.0
    %v765 = vadd.f32 %v763, %v764
    %v766 = vsel %vm684, %v756, 0.0
    %v767 = vadd.f32 %v765, %v766
    %768 = vadd.xlane.f32.xlu0 %v767
    %v769 = vpop.xlane.xlu0 %768
    %v770 = vrot.slane %v769, 4
    %v771 = vadd.f32 %v769, %v770
    %v772 = vrot.slane %v771, 2
    %v773 = vadd.f32 %v771, %v772
    %v774 = vrot.slane %v773, 1
    %v775 = vadd.f32 %v773, %v774
    %s776 = vtos %v775
    %v777 = vstv %s776
    %v778 = vmul.f32 %v161, %v161
    %v779 = vmul.f32 %v163, %v163
    %v780 = vmul.f32 %v165, %v165
    %v781 = vmul.f32 %v167, %v167
    %782 = vadd.xlane.f32.xlu0 %v778
    %v783 = vpop.xlane.xlu0 %782
    %784 = vadd.xlane.f32.xlu0 %v779
    %v785 = vpop.xlane.xlu0 %784
    %786 = vadd.xlane.f32.xlu0 %v780
    %v787 = vpop.xlane.xlu0 %786
    %788 = vadd.xlane.f32.xlu0 %v781
    %v789 = vpop.xlane.xlu0 %788
    %v790 = vrsqrt.pop %v783
    %v791 = vmul.f32 %v783, %v790
    %vm792 = vcmp.eq.f32.partialorder %v783, inf
    %v793 = vsel %vm792, %v783, %v791
    %vm794 = vcmp.eq.f32.partialorder %v783, 0.0
    %v795 = vand.u32 %v783, 2147483648
    %v796 = vsel %vm794, %v795, %v793
    %v797 = vrsqrt.pop %v785
    %v798 = vmul.f32 %v785, %v797
    %vm799 = vcmp.eq.f32.partialorder %v785, inf
    %v800 = vsel %vm799, %v785, %v798
    %vm801 = vcmp.eq.f32.partialorder %v785, 0.0
    %v802 = vand.u32 %v785, 2147483648
    %v803 = vsel %vm801, %v802, %v800
    %v804 = vrsqrt.pop %v787
    %v805 = vmul.f32 %v787, %v804
    %vm806 = vcmp.eq.f32.partialorder %v787, inf
    %v807 = vsel %vm806, %v787, %v805
    %vm808 = vcmp.eq.f32.partialorder %v787, 0.0
    %v809 = vand.u32 %v787, 2147483648
    %v810 = vsel %vm808, %v809, %v807
    %v811 = vrsqrt.pop %v789
    %v812 = vmul.f32 %v789, %v811
    %vm813 = vcmp.eq.f32.partialorder %v789, inf
    %v814 = vsel %vm813, %v789, %v812
    %vm815 = vcmp.eq.f32.partialorder %v789, 0.0
    %v816 = vand.u32 %v789, 2147483648
    %v817 = vsel %vm815, %v816, %v814
    %v818 = vmul.f32 %v636, %v796
    %v819 = vmul.f32 %v637, %v803
    %v820 = vmul.f32 %v638, %v810
    %v821 = vmul.f32 %v639, %v817
    %826 = vrot.lane.b32.xlu0 %v818, 126
    %v827 = vpop.permute.xlu0 %826
    %828 = vrot.lane.b32.xlu0 %v819, 126
    %v829 = vpop.permute.xlu0 %828
    %830 = vrot.lane.b32.xlu0 %v820, 126
    %v831 = vpop.permute.xlu0 %830
    %832 = vrot.lane.b32.xlu0 %v821, 126
    %v833 = vpop.permute.xlu0 %832
    %v838 = vsel %vm684, %v827, 0.0
    %v839 = vsel %vm684, %v829, 0.0
    %v840 = vadd.f32 %v838, %v839
    %v841 = vsel %vm684, %v831, 0.0
    %v842 = vadd.f32 %v840, %v841
    %v843 = vsel %vm684, %v833, 0.0
    %v844 = vadd.f32 %v842, %v843
    %845 = vadd.xlane.f32.xlu0 %v844
    %v846 = vpop.xlane.xlu0 %845
    %v847 = vrot.slane %v846, 4
    %v848 = vadd.f32 %v846, %v847
    %v849 = vrot.slane %v848, 2
    %v850 = vadd.f32 %v848, %v849
    %v851 = vrot.slane %v850, 1
    %v852 = vadd.f32 %v850, %v851
    %s853 = vtos %v852
    %v854 = vstv %s853
    %v855 = vadd.f32 %v777, %v854
    %v856 = vmul.f32 %v855, 0.01
    %v857 = vmul.f32 %v128, %v128
    %v858 = vmul.f32 %v129, %v129
    %v859 = vmul.f32 %v130, %v130
    %v860 = vmul.f32 %v131, %v131
    %861 = vadd.xlane.f32.xlu0 %v857
    %v862 = vpop.xlane.xlu0 %861
    %863 = vadd.xlane.f32.xlu0 %v858
    %v864 = vpop.xlane.xlu0 %863
    %865 = vadd.xlane.f32.xlu0 %v859
    %v866 = vpop.xlane.xlu0 %865
    %867 = vadd.xlane.f32.xlu0 %v860
    %v868 = vpop.xlane.xlu0 %867
    %v869 = vrsqrt.pop %v862
    %v870 = vmul.f32 %v862, %v869
    %vm871 = vcmp.eq.f32.partialorder %v862, inf
    %v872 = vsel %vm871, %v862, %v870
    %vm873 = vcmp.eq.f32.partialorder %v862, 0.0
    %v874 = vand.u32 %v862, 2147483648
    %v875 = vsel %vm873, %v874, %v872
    %v876 = vrsqrt.pop %v864
    %v877 = vmul.f32 %v864, %v876
    %vm878 = vcmp.eq.f32.partialorder %v864, inf
    %v879 = vsel %vm878, %v864, %v877
    %vm880 = vcmp.eq.f32.partialorder %v864, 0.0
    %v881 = vand.u32 %v864, 2147483648
    %v882 = vsel %vm880, %v881, %v879
    %v883 = vrsqrt.pop %v866
    %v884 = vmul.f32 %v866, %v883
    %vm885 = vcmp.eq.f32.partialorder %v866, inf
    %v886 = vsel %vm885, %v866, %v884
    %vm887 = vcmp.eq.f32.partialorder %v866, 0.0
    %v888 = vand.u32 %v866, 2147483648
    %v889 = vsel %vm887, %v888, %v886
    %v890 = vrsqrt.pop %v868
    %v891 = vmul.f32 %v868, %v890
    %vm892 = vcmp.eq.f32.partialorder %v868, inf
    %v893 = vsel %vm892, %v868, %v891
    %vm894 = vcmp.eq.f32.partialorder %v868, 0.0
    %v895 = vand.u32 %v868, 2147483648
    %v896 = vsel %vm894, %v895, %v893
    %v897 = vmul.f32 %v636, %v875
    %v898 = vmul.f32 %v637, %v882
    %v899 = vmul.f32 %v638, %v889
    %v900 = vmul.f32 %v639, %v896
    %905 = vrot.lane.b32.xlu0 %v897, 126
    %v906 = vpop.permute.xlu0 %905
    %907 = vrot.lane.b32.xlu0 %v898, 126
    %v908 = vpop.permute.xlu0 %907
    %909 = vrot.lane.b32.xlu0 %v899, 126
    %v910 = vpop.permute.xlu0 %909
    %911 = vrot.lane.b32.xlu0 %v900, 126
    %v912 = vpop.permute.xlu0 %911
    %v917 = vsel %vm684, %v906, 0.0
    %v918 = vsel %vm684, %v908, 0.0
    %v919 = vadd.f32 %v917, %v918
    %v920 = vsel %vm684, %v910, 0.0
    %v921 = vadd.f32 %v919, %v920
    %v922 = vsel %vm684, %v912, 0.0
    %v923 = vadd.f32 %v921, %v922
    %924 = vadd.xlane.f32.xlu0 %v923
    %v925 = vpop.xlane.xlu0 %924
    %v926 = vrot.slane %v925, 4
    %v927 = vadd.f32 %v925, %v926
    %v928 = vrot.slane %v927, 2
    %v929 = vadd.f32 %v927, %v928
    %v930 = vrot.slane %v929, 1
    %v931 = vadd.f32 %v929, %v930
    %s932 = vtos %v931
    %v933 = vstv %s932
    %v934 = vmul.f32 %v132, %v132
    %v935 = vmul.f32 %v133, %v133
    %v936 = vmul.f32 %v134, %v134
    %v937 = vmul.f32 %v135, %v135
    %938 = vadd.xlane.f32.xlu0 %v934
    %v939 = vpop.xlane.xlu0 %938
    %940 = vadd.xlane.f32.xlu0 %v935
    %v941 = vpop.xlane.xlu0 %940
    %942 = vadd.xlane.f32.xlu0 %v936
    %v943 = vpop.xlane.xlu0 %942
    %944 = vadd.xlane.f32.xlu0 %v937
    %v945 = vpop.xlane.xlu0 %944
    %v946 = vrsqrt.pop %v939
    %v947 = vmul.f32 %v939, %v946
    %vm948 = vcmp.eq.f32.partialorder %v939, inf
    %v949 = vsel %vm948, %v939, %v947
    %vm950 = vcmp.eq.f32.partialorder %v939, 0.0
    %v951 = vand.u32 %v939, 2147483648
    %v952 = vsel %vm950, %v951, %v949
    %v953 = vrsqrt.pop %v941
    %v954 = vmul.f32 %v941, %v953
    %vm955 = vcmp.eq.f32.partialorder %v941, inf
    %v956 = vsel %vm955, %v941, %v954
    %vm957 = vcmp.eq.f32.partialorder %v941, 0.0
    %v958 = vand.u32 %v941, 2147483648
    %v959 = vsel %vm957, %v958, %v956
    %v960 = vrsqrt.pop %v943
    %v961 = vmul.f32 %v943, %v960
    %vm962 = vcmp.eq.f32.partialorder %v943, inf
    %v963 = vsel %vm962, %v943, %v961
    %vm964 = vcmp.eq.f32.partialorder %v943, 0.0
    %v965 = vand.u32 %v943, 2147483648
    %v966 = vsel %vm964, %v965, %v963
    %v967 = vrsqrt.pop %v945
    %v968 = vmul.f32 %v945, %v967
    %vm969 = vcmp.eq.f32.partialorder %v945, inf
    %v970 = vsel %vm969, %v945, %v968
    %vm971 = vcmp.eq.f32.partialorder %v945, 0.0
    %v972 = vand.u32 %v945, 2147483648
    %v973 = vsel %vm971, %v972, %v970
    %v974 = vmul.f32 %v636, %v952
    %v975 = vmul.f32 %v637, %v959
    %v976 = vmul.f32 %v638, %v966
    %v977 = vmul.f32 %v639, %v973
    %982 = vrot.lane.b32.xlu0 %v974, 126
    %v983 = vpop.permute.xlu0 %982
    %984 = vrot.lane.b32.xlu0 %v975, 126
    %v985 = vpop.permute.xlu0 %984
    %986 = vrot.lane.b32.xlu0 %v976, 126
    %v987 = vpop.permute.xlu0 %986
    %988 = vrot.lane.b32.xlu0 %v977, 126
    %v989 = vpop.permute.xlu0 %988
    %v994 = vsel %vm684, %v983, 0.0
    %v995 = vsel %vm684, %v985, 0.0
    %v996 = vadd.f32 %v994, %v995
    %v997 = vsel %vm684, %v987, 0.0
    %v998 = vadd.f32 %v996, %v997
    %v999 = vsel %vm684, %v989, 0.0
    %v1000 = vadd.f32 %v998, %v999
    %1001 = vadd.xlane.f32.xlu0 %v1000
    %v1002 = vpop.xlane.xlu0 %1001
    %v1003 = vrot.slane %v1002, 4
    %v1004 = vadd.f32 %v1002, %v1003
    %v1005 = vrot.slane %v1004, 2
    %v1006 = vadd.f32 %v1004, %v1005
    %v1007 = vrot.slane %v1006, 1
    %v1008 = vadd.f32 %v1006, %v1007
    %s1009 = vtos %v1008
    %v1010 = vstv %s1009
    %v1011 = vadd.f32 %v933, %v1010
    %v1012 = vmul.f32 %v1011, 0.01
    %v1013 = vadd.f32 %v856, %v1012
    %v1014 = vmul.f32 %v136, 1.442695
    %v1015 = vpow.pop %v1014
    %v1016 = vmul.f32 %v137, 1.442695
    %v1017 = vpow.pop %v1016
    %v1018 = vmul.f32 %v138, 1.442695
    %v1019 = vpow.pop %v1018
    %v1020 = vmul.f32 %v139, 1.442695
    %v1021 = vpow.pop %v1020
    %v1022 = vmul.f32 %v1015, %v1015
    %v1023 = vmul.f32 %v1017, %v1017
    %v1024 = vmul.f32 %v1019, %v1019
    %v1025 = vmul.f32 %v1021, %v1021
    %1026 = vadd.xlane.f32.xlu0 %v1022
    %v1027 = vpop.xlane.xlu0 %1026
    %1028 = vadd.xlane.f32.xlu0 %v1023
    %v1029 = vpop.xlane.xlu0 %1028
    %1030 = vadd.xlane.f32.xlu0 %v1024
    %v1031 = vpop.xlane.xlu0 %1030
    %1032 = vadd.xlane.f32.xlu0 %v1025
    %v1033 = vpop.xlane.xlu0 %1032
    %v1034 = vrsqrt.pop %v1027
    %v1035 = vmul.f32 %v1027, %v1034
    %vm1036 = vcmp.eq.f32.partialorder %v1027, inf
    %v1037 = vsel %vm1036, %v1027, %v1035
    %vm1038 = vcmp.eq.f32.partialorder %v1027, 0.0
    %v1039 = vand.u32 %v1027, 2147483648
    %v1040 = vsel %vm1038, %v1039, %v1037
    %v1041 = vrsqrt.pop %v1029
    %v1042 = vmul.f32 %v1029, %v1041
    %vm1043 = vcmp.eq.f32.partialorder %v1029, inf
    %v1044 = vsel %vm1043, %v1029, %v1042
    %vm1045 = vcmp.eq.f32.partialorder %v1029, 0.0
    %v1046 = vand.u32 %v1029, 2147483648
    %v1047 = vsel %vm1045, %v1046, %v1044
    %v1048 = vrsqrt.pop %v1031
    %v1049 = vmul.f32 %v1031, %v1048
    %vm1050 = vcmp.eq.f32.partialorder %v1031, inf
    %v1051 = vsel %vm1050, %v1031, %v1049
    %vm1052 = vcmp.eq.f32.partialorder %v1031, 0.0
    %v1053 = vand.u32 %v1031, 2147483648
    %v1054 = vsel %vm1052, %v1053, %v1051
    %v1055 = vrsqrt.pop %v1033
    %v1056 = vmul.f32 %v1033, %v1055
    %vm1057 = vcmp.eq.f32.partialorder %v1033, inf
    %v1058 = vsel %vm1057, %v1033, %v1056
    %vm1059 = vcmp.eq.f32.partialorder %v1033, 0.0
    %v1060 = vand.u32 %v1033, 2147483648
    %v1061 = vsel %vm1059, %v1060, %v1058
    %v1062 = vmul.f32 %v636, %v1040
    %v1063 = vmul.f32 %v637, %v1047
    %v1064 = vmul.f32 %v638, %v1054
    %v1065 = vmul.f32 %v639, %v1061
    %1070 = vrot.lane.b32.xlu0 %v1062, 126
    %v1071 = vpop.permute.xlu0 %1070
    %1072 = vrot.lane.b32.xlu0 %v1063, 126
    %v1073 = vpop.permute.xlu0 %1072
    %1074 = vrot.lane.b32.xlu0 %v1064, 126
    %v1075 = vpop.permute.xlu0 %1074
    %1076 = vrot.lane.b32.xlu0 %v1065, 126
    %v1077 = vpop.permute.xlu0 %1076
    %v1082 = vsel %vm684, %v1071, 0.0
    %v1083 = vsel %vm684, %v1073, 0.0
    %v1084 = vadd.f32 %v1082, %v1083
    %v1085 = vsel %vm684, %v1075, 0.0
    %v1086 = vadd.f32 %v1084, %v1085
    %v1087 = vsel %vm684, %v1077, 0.0
    %v1088 = vadd.f32 %v1086, %v1087
    %1089 = vadd.xlane.f32.xlu0 %v1088
    %v1090 = vpop.xlane.xlu0 %1089
    %v1091 = vrot.slane %v1090, 4
    %v1092 = vadd.f32 %v1090, %v1091
    %v1093 = vrot.slane %v1092, 2
    %v1094 = vadd.f32 %v1092, %v1093
    %v1095 = vrot.slane %v1094, 1
    %v1096 = vadd.f32 %v1094, %v1095
    %s1097 = vtos %v1096
    %v1098 = vstv %s1097
    %v1099 = vmul.f32 %v140, 1.442695
    %v1100 = vpow.pop %v1099
    %v1101 = vmul.f32 %v141, 1.442695
    %v1102 = vpow.pop %v1101
    %v1103 = vmul.f32 %v142, 1.442695
    %v1104 = vpow.pop %v1103
    %v1105 = vmul.f32 %v143, 1.442695
    %v1106 = vpow.pop %v1105
    %v1107 = vmul.f32 %v1100, %v1100
    %v1108 = vmul.f32 %v1102, %v1102
    %v1109 = vmul.f32 %v1104, %v1104
    %v1110 = vmul.f32 %v1106, %v1106
    %1111 = vadd.xlane.f32.xlu0 %v1107
    %v1112 = vpop.xlane.xlu0 %1111
    %1113 = vadd.xlane.f32.xlu0 %v1108
    %v1114 = vpop.xlane.xlu0 %1113
    %1115 = vadd.xlane.f32.xlu0 %v1109
    %v1116 = vpop.xlane.xlu0 %1115
    %1117 = vadd.xlane.f32.xlu0 %v1110
    %v1118 = vpop.xlane.xlu0 %1117
    %v1119 = vrsqrt.pop %v1112
    %v1120 = vmul.f32 %v1112, %v1119
    %vm1121 = vcmp.eq.f32.partialorder %v1112, inf
    %v1122 = vsel %vm1121, %v1112, %v1120
    %vm1123 = vcmp.eq.f32.partialorder %v1112, 0.0
    %v1124 = vand.u32 %v1112, 2147483648
    %v1125 = vsel %vm1123, %v1124, %v1122
    %v1126 = vrsqrt.pop %v1114
    %v1127 = vmul.f32 %v1114, %v1126
    %vm1128 = vcmp.eq.f32.partialorder %v1114, inf
    %v1129 = vsel %vm1128, %v1114, %v1127
    %vm1130 = vcmp.eq.f32.partialorder %v1114, 0.0
    %v1131 = vand.u32 %v1114, 2147483648
    %v1132 = vsel %vm1130, %v1131, %v1129
    %v1133 = vrsqrt.pop %v1116
    %v1134 = vmul.f32 %v1116, %v1133
    %vm1135 = vcmp.eq.f32.partialorder %v1116, inf
    %v1136 = vsel %vm1135, %v1116, %v1134
    %vm1137 = vcmp.eq.f32.partialorder %v1116, 0.0
    %v1138 = vand.u32 %v1116, 2147483648
    %v1139 = vsel %vm1137, %v1138, %v1136
    %v1140 = vrsqrt.pop %v1118
    %v1141 = vmul.f32 %v1118, %v1140
    %vm1142 = vcmp.eq.f32.partialorder %v1118, inf
    %v1143 = vsel %vm1142, %v1118, %v1141
    %vm1144 = vcmp.eq.f32.partialorder %v1118, 0.0
    %v1145 = vand.u32 %v1118, 2147483648
    %v1146 = vsel %vm1144, %v1145, %v1143
    %v1147 = vmul.f32 %v636, %v1125
    %v1148 = vmul.f32 %v637, %v1132
    %v1149 = vmul.f32 %v638, %v1139
    %v1150 = vmul.f32 %v639, %v1146
    %1155 = vrot.lane.b32.xlu0 %v1147, 126
    %v1156 = vpop.permute.xlu0 %1155
    %1157 = vrot.lane.b32.xlu0 %v1148, 126
    %v1158 = vpop.permute.xlu0 %1157
    %1159 = vrot.lane.b32.xlu0 %v1149, 126
    %v1160 = vpop.permute.xlu0 %1159
    %1161 = vrot.lane.b32.xlu0 %v1150, 126
    %v1162 = vpop.permute.xlu0 %1161
    %v1167 = vsel %vm684, %v1156, 0.0
    %v1168 = vsel %vm684, %v1158, 0.0
    %v1169 = vadd.f32 %v1167, %v1168
    %v1170 = vsel %vm684, %v1160, 0.0
    %v1171 = vadd.f32 %v1169, %v1170
    %v1172 = vsel %vm684, %v1162, 0.0
    %v1173 = vadd.f32 %v1171, %v1172
    %1174 = vadd.xlane.f32.xlu0 %v1173
    %v1175 = vpop.xlane.xlu0 %1174
    %v1176 = vrot.slane %v1175, 4
    %v1177 = vadd.f32 %v1175, %v1176
    %v1178 = vrot.slane %v1177, 2
    %v1179 = vadd.f32 %v1177, %v1178
    %v1180 = vrot.slane %v1179, 1
    %v1181 = vadd.f32 %v1179, %v1180
    %s1182 = vtos %v1181
    %v1183 = vstv %s1182
    %v1184 = vadd.f32 %v1098, %v1183
    %v1185 = vmul.f32 %v1184, 0.01
    %v1186 = vadd.f32 %v1013, %v1185
    %v1187 = vmul.f32 %v173, %v173
    %v1188 = vmul.f32 %v175, %v175
    %v1189 = vmul.f32 %v177, %v177
    %v1190 = vmul.f32 %v179, %v179
    %1191 = vadd.xlane.f32.xlu0 %v1187
    %v1192 = vpop.xlane.xlu0 %1191
    %1193 = vadd.xlane.f32.xlu0 %v1188
    %v1194 = vpop.xlane.xlu0 %1193
    %1195 = vadd.xlane.f32.xlu0 %v1189
    %v1196 = vpop.xlane.xlu0 %1195
    %1197 = vadd.xlane.f32.xlu0 %v1190
    %v1198 = vpop.xlane.xlu0 %1197
    %v1199 = vrsqrt.pop %v1192
    %v1200 = vmul.f32 %v1192, %v1199
    %vm1201 = vcmp.eq.f32.partialorder %v1192, inf
    %v1202 = vsel %vm1201, %v1192, %v1200
    %vm1203 = vcmp.eq.f32.partialorder %v1192, 0.0
    %v1204 = vand.u32 %v1192, 2147483648
    %v1205 = vsel %vm1203, %v1204, %v1202
    %v1206 = vrsqrt.pop %v1194
    %v1207 = vmul.f32 %v1194, %v1206
    %vm1208 = vcmp.eq.f32.partialorder %v1194, inf
    %v1209 = vsel %vm1208, %v1194, %v1207
    %vm1210 = vcmp.eq.f32.partialorder %v1194, 0.0
    %v1211 = vand.u32 %v1194, 2147483648
    %v1212 = vsel %vm1210, %v1211, %v1209
    %v1213 = vrsqrt.pop %v1196
    %v1214 = vmul.f32 %v1196, %v1213
    %vm1215 = vcmp.eq.f32.partialorder %v1196, inf
    %v1216 = vsel %vm1215, %v1196, %v1214
    %vm1217 = vcmp.eq.f32.partialorder %v1196, 0.0
    %v1218 = vand.u32 %v1196, 2147483648
    %v1219 = vsel %vm1217, %v1218, %v1216
    %v1220 = vrsqrt.pop %v1198
    %v1221 = vmul.f32 %v1198, %v1220
    %vm1222 = vcmp.eq.f32.partialorder %v1198, inf
    %v1223 = vsel %vm1222, %v1198, %v1221
    %vm1224 = vcmp.eq.f32.partialorder %v1198, 0.0
    %v1225 = vand.u32 %v1198, 2147483648
    %v1226 = vsel %vm1224, %v1225, %v1223
    %v1227 = vmul.f32 %v636, %v1205
    %v1228 = vmul.f32 %v637, %v1212
    %v1229 = vmul.f32 %v638, %v1219
    %v1230 = vmul.f32 %v639, %v1226
    %1235 = vrot.lane.b32.xlu0 %v1227, 126
    %v1236 = vpop.permute.xlu0 %1235
    %1237 = vrot.lane.b32.xlu0 %v1228, 126
    %v1238 = vpop.permute.xlu0 %1237
    %1239 = vrot.lane.b32.xlu0 %v1229, 126
    %v1240 = vpop.permute.xlu0 %1239
    %1241 = vrot.lane.b32.xlu0 %v1230, 126
    %v1242 = vpop.permute.xlu0 %1241
    %v1247 = vsel %vm684, %v1236, 0.0
    %v1248 = vsel %vm684, %v1238, 0.0
    %v1249 = vadd.f32 %v1247, %v1248
    %v1250 = vsel %vm684, %v1240, 0.0
    %v1251 = vadd.f32 %v1249, %v1250
    %v1252 = vsel %vm684, %v1242, 0.0
    %v1253 = vadd.f32 %v1251, %v1252
    %1254 = vadd.xlane.f32.xlu0 %v1253
    %v1255 = vpop.xlane.xlu0 %1254
    %v1256 = vrot.slane %v1255, 4
    %v1257 = vadd.f32 %v1255, %v1256
    %v1258 = vrot.slane %v1257, 2
    %v1259 = vadd.f32 %v1257, %v1258
    %v1260 = vrot.slane %v1259, 1
    %v1261 = vadd.f32 %v1259, %v1260
    %s1262 = vtos %v1261
    %v1263 = vstv %s1262
    %v1264 = vmul.f32 %v185, %v185
    %v1265 = vmul.f32 %v187, %v187
    %v1266 = vmul.f32 %v189, %v189
    %v1267 = vmul.f32 %v191, %v191
    %1268 = vadd.xlane.f32.xlu0 %v1264
    %v1269 = vpop.xlane.xlu0 %1268
    %1270 = vadd.xlane.f32.xlu0 %v1265
    %v1271 = vpop.xlane.xlu0 %1270
    %1272 = vadd.xlane.f32.xlu0 %v1266
    %v1273 = vpop.xlane.xlu0 %1272
    %1274 = vadd.xlane.f32.xlu0 %v1267
    %v1275 = vpop.xlane.xlu0 %1274
    %v1276 = vrsqrt.pop %v1269
    %v1277 = vmul.f32 %v1269, %v1276
    %vm1278 = vcmp.eq.f32.partialorder %v1269, inf
    %v1279 = vsel %vm1278, %v1269, %v1277
    %vm1280 = vcmp.eq.f32.partialorder %v1269, 0.0
    %v1281 = vand.u32 %v1269, 2147483648
    %v1282 = vsel %vm1280, %v1281, %v1279
    %v1283 = vrsqrt.pop %v1271
    %v1284 = vmul.f32 %v1271, %v1283
    %vm1285 = vcmp.eq.f32.partialorder %v1271, inf
    %v1286 = vsel %vm1285, %v1271, %v1284
    %vm1287 = vcmp.eq.f32.partialorder %v1271, 0.0
    %v1288 = vand.u32 %v1271, 2147483648
    %v1289 = vsel %vm1287, %v1288, %v1286
    %v1290 = vrsqrt.pop %v1273
    %v1291 = vmul.f32 %v1273, %v1290
    %vm1292 = vcmp.eq.f32.partialorder %v1273, inf
    %v1293 = vsel %vm1292, %v1273, %v1291
    %vm1294 = vcmp.eq.f32.partialorder %v1273, 0.0
    %v1295 = vand.u32 %v1273, 2147483648
    %v1296 = vsel %vm1294, %v1295, %v1293
    %v1297 = vrsqrt.pop %v1275
    %v1298 = vmul.f32 %v1275, %v1297
    %vm1299 = vcmp.eq.f32.partialorder %v1275, inf
    %v1300 = vsel %vm1299, %v1275, %v1298
    %vm1301 = vcmp.eq.f32.partialorder %v1275, 0.0
    %v1302 = vand.u32 %v1275, 2147483648
    %v1303 = vsel %vm1301, %v1302, %v1300
    %v1304 = vmul.f32 %v636, %v1282
    %v1305 = vmul.f32 %v637, %v1289
    %v1306 = vmul.f32 %v638, %v1296
    %v1307 = vmul.f32 %v639, %v1303
    %1312 = vrot.lane.b32.xlu0 %v1304, 126
    %v1313 = vpop.permute.xlu0 %1312
    %1314 = vrot.lane.b32.xlu0 %v1305, 126
    %v1315 = vpop.permute.xlu0 %1314
    %1316 = vrot.lane.b32.xlu0 %v1306, 126
    %v1317 = vpop.permute.xlu0 %1316
    %1318 = vrot.lane.b32.xlu0 %v1307, 126
    %v1319 = vpop.permute.xlu0 %1318
    %v1324 = vsel %vm684, %v1313, 0.0
    %v1325 = vsel %vm684, %v1315, 0.0
    %v1326 = vadd.f32 %v1324, %v1325
    %v1327 = vsel %vm684, %v1317, 0.0
    %v1328 = vadd.f32 %v1326, %v1327
    %v1329 = vsel %vm684, %v1319, 0.0
    %v1330 = vadd.f32 %v1328, %v1329
    %1331 = vadd.xlane.f32.xlu0 %v1330
    %v1332 = vpop.xlane.xlu0 %1331
    %v1333 = vrot.slane %v1332, 4
    %v1334 = vadd.f32 %v1332, %v1333
    %v1335 = vrot.slane %v1334, 2
    %v1336 = vadd.f32 %v1334, %v1335
    %v1337 = vrot.slane %v1336, 1
    %v1338 = vadd.f32 %v1336, %v1337
    %s1339 = vtos %v1338
    %v1340 = vstv %s1339
    %v1341 = vadd.f32 %v1263, %v1340
    %v1342 = vmul.f32 %v1341, 0.01
    %v1343 = vadd.f32 %v1186, %v1342
    %v1344 = vlaneseq
    %v1345 = vshrl.u32 %v1344, 7
    %vm1346 = vcmp.eq.s32.totalorder %v1345, 0
    %v1347 = vstv %s700
    %v1348 = vsel %vm1346, %v1347, %v1343
    %1349 = vst [vmem:[#allocation14] sm:$0xff] %v1348
    // Predicated region
    $region66: #{tpu_custom_call.1} parent=1 // pred_check
      _
    $region67: #{tpu_custom_call.1} parent=1 // pred_check_branch
      %1351 = sbr.rel (0) target = $region69
    $region68: #{tpu_custom_call.1} parent=1 // pred_region
      %s1353 = ssub.s32 128, 128
      %1354 = vsyncadd [#allocation4], %s1353
      %s1356 = sshll.u32 [#allocation14], 4
      %s1357 = int_to_ptr.vmem [resolvable:$true] %s1356
      %1359 = dma.vmem_to_hbm [thread:$0]  %s1357, 128, %s9, [#allocation4]
    $region69: #{tpu_custom_call.1} parent=1 // pred_fallthru
      _
    // Predicated region
    $region70: #{tpu_custom_call.1} parent=1 // pred_check
      _
    $region71: #{tpu_custom_call.1} parent=1 // pred_check_branch
      %1361 = sbr.rel (0) target = $region73
    $region72: #{tpu_custom_call.1} parent=1 // pred_region
      %1362 = dma.done [#allocation4], 128
    $region73: #{tpu_custom_call.1} parent=1 // pred_fallthru
      _
    %1363 = vsyncpa [#allocation3], 1
    %1364 = vsyncpa [#allocation6], 1
    %1365 = vsyncpa [#allocation9], 1
    %1366 = vsyncpa [#allocation12], 1
    %1367 = vsyncpa [#allocation4], 1

</llo_original>
